<compile_context>
chip_gen: v6e
topology: v6e:2x2x1
jax: 0.10.0
libtpu: 0.0.40
codegen_flags: <defaults>
</compile_context>

<pallas_src>
import functools
import math

import numpy as np
import jax
import jax.numpy as jnp
from jax.experimental import pallas as pl
from jax.experimental.pallas import tpu as pltpu


def _largest_divisor_leq(n, cap):
    for t in range(min(n, cap), 0, -1):
        if n % t == 0:
            return t
    return 1


def _linformer_cross_attn_kernel(
        x1_ref, x_ref, wq_ref, wk_ref, wv_ref, pkv_ref, wo_ref, bo_ref,
        seg_ref, segt_ref, o_ref, xkv_acc,
        *, heads, dim_head, block_b, k_proj, compute_dtype):
    n_idx = pl.program_id(1)
    n_last = pl.num_programs(1) - 1
    cdt = compute_dtype
    hd = heads * dim_head

    # ---- phase 1: accumulate the Linformer sequence down-projection --------
    #   xkv_acc[b] += [proj_k^T ; proj_v^T][:, tile] @ x[b, tile, :]  -> (2K, D)
    @pl.when(n_idx == 0)
    def _init():
        xkv_acc[...] = jnp.zeros_like(xkv_acc)

    pkv = pkv_ref[...].astype(cdt)                 # (2K, tn), cast hoisted
    for bi in range(block_b):                      # one (2K,tn)@(tn,D) per row
        xkv_acc[bi] += jnp.dot(pkv, x_ref[bi].astype(cdt),
                               preferred_element_type=jnp.float32)

    # ---- phase 2: attention + fused output projection (last seq tile) ------
    @pl.when(n_idx == n_last)
    def _finalize():
        d = wq_ref.shape[0]
        scale = dim_head ** (-0.5)
        seg = seg_ref[...]                         # (H*Dh, H) 0/1, f32
        seg_t = segt_ref[...]                      # (H, H*Dh) 0/1, f32

        # Q projection for the whole batch block, scale folded in. (Bt, H*Dh)
        q = jnp.dot(x1_ref[...].astype(cdt), wq_ref[...].astype(cdt),
                    preferred_element_type=jnp.float32) * scale

        # K/V projections batched over (batch, K):  (Bt*K, H*Dh)
        # NOTE: k_proj is assumed to be a multiple of 8 (sublane-aligned slice).
        xk = xkv_acc[:, :k_proj, :].reshape(block_b * k_proj, d).astype(cdt)
        xv = xkv_acc[:, k_proj:, :].reshape(block_b * k_proj, d).astype(cdt)
        kp = jnp.dot(xk, wk_ref[...].astype(cdt),
                     preferred_element_type=jnp.float32)
        vp = jnp.dot(xv, wv_ref[...].astype(cdt),
                     preferred_element_type=jnp.float32)

        # Per-head logits: elementwise q*k, then segment-sum each head's Dh
        # lanes with one (Bt*K, H*Dh) @ (H*Dh, H) matmul.  Logits / softmax
        # stay f32 even when compute_dtype is bf16.
        kq = kp.reshape(block_b, k_proj, hd) * q[:, None, :]
        dots = jnp.dot(kq.reshape(block_b * k_proj, hd), seg,
                       preferred_element_type=jnp.float32)
        dots = dots.reshape(block_b, k_proj, heads)        # (Bt, K, H)

        m = jnp.max(dots, axis=1, keepdims=True)           # (Bt, 1, H)
        p = jnp.exp(dots - m)
        denom = jnp.sum(p, axis=1, keepdims=True)
        attn = p * pl.reciprocal(denom, approx=True)       # softmax over K

        # Broadcast per-head weights back to H*Dh lanes, reduce over K.
        attn_e = jnp.dot(attn.reshape(block_b * k_proj, heads), seg_t,
                         preferred_element_type=jnp.float32)
        ctx = jnp.sum(attn_e.reshape(block_b, k_proj, hd)
                      * vp.reshape(block_b, k_proj, hd), axis=1)   # (Bt, H*Dh)

        # Single fused output projection + bias for the whole batch block.
        y = jnp.dot(ctx.astype(cdt), wo_ref[...].astype(cdt),
                    preferred_element_type=jnp.float32) + bo_ref[...]
        o_ref[...] = y.astype(o_ref.dtype)


def _build_specs(d, hd, heads, k_proj, block_b, block_n, single_buffer):
    kw = {"pipeline_mode": pl.Buffered(1)} if single_buffer else {}
    const2 = lambda i, j: (0, 0)
    in_specs = [
        pl.BlockSpec((block_b, None, d), lambda i, j: (i, 0, 0)),      # x1
        pl.BlockSpec((block_b, block_n, d), lambda i, j: (i, j, 0)),   # x
        pl.BlockSpec((d, hd), const2, **kw),                           # Wq^T
        pl.BlockSpec((d, hd), const2, **kw),                           # Wk^T
        pl.BlockSpec((d, hd), const2, **kw),                           # Wv^T
        pl.BlockSpec((2 * k_proj, block_n), lambda i, j: (0, j)),      # [pk;pv]^T
        pl.BlockSpec((hd, d), const2, **kw),                           # Wo^T
        pl.BlockSpec((1, d), const2, **kw),                            # b_o
        pl.BlockSpec((hd, heads), const2, **kw),                       # seg
        pl.BlockSpec((heads, hd), const2, **kw),                       # seg^T
    ]
    out_specs = pl.BlockSpec((block_b, None, d), lambda i, j: (i, 0, 0))
    return in_specs, out_specs


def linformer_cross_attention(x1, x, params, *, heads, dim_head, k_proj,
                              block_b=None, block_n=None,
                              compute_dtype=jnp.float32):
    b, n, d = x.shape
    hd = heads * dim_head
    assert x1.shape == (b, 1, d)

    if block_b is None:
        # keep grid[0] >= 2 (v7x megacore sharding) and bound f32 scratch.
        cap = max(1, min(4, b // 2))
        block_b = _largest_divisor_leq(b, cap)
    if block_n is None:
        block_n = _largest_divisor_leq(n, 512)
    assert b % block_b == 0 and n % block_n == 0

    # Head-segment matrices: seg[e, h] = 1 iff feature lane e belongs to head h.
    head_of_lane = np.repeat(np.arange(heads), dim_head)
    seg = (head_of_lane[:, None] == np.arange(heads)[None, :]).astype(np.float32)
    seg_t = np.ascontiguousarray(seg.T)

    # VMEM budget: scratch + double-buffered x / pkv tiles + single-buffered
    # weights, clamped to ~75% of physical VMEM (96 MiB v5e/v6e, 48 MiB v7x).
    itemsize = jnp.dtype(x.dtype).itemsize
    est = (block_b * 2 * k_proj * d * 4
           + 2 * block_b * block_n * d * itemsize
           + 2 * 2 * k_proj * block_n * itemsize
           + (3 * d * hd + hd * d + d) * itemsize
           + 2 * hd * heads * 4
           + 2 * 2 * block_b * d * itemsize)
    try:
        phys = getattr(pltpu.get_tpu_info(), "vmem_capacity_bytes",
                       64 * 1024 * 1024)
    except Exception:
        phys = 64 * 1024 * 1024
    vmem_limit = int(min(max(2 * est, 32 * 1024 * 1024), 0.75 * phys))

    kernel = functools.partial(
        _linformer_cross_attn_kernel, heads=heads, dim_head=dim_head,
        block_b=block_b, k_proj=k_proj, compute_dtype=compute_dtype)

    grid = (b // block_b, n // block_n)

    def run(single_buffer):
        in_specs, out_specs = _build_specs(d, hd, heads, k_proj,
                                           block_b, block_n, single_buffer)
        return pl.pallas_call(
            kernel,
            out_shape=jax.ShapeDtypeStruct((b, 1, d), x.dtype),
            grid_spec=pltpu.PrefetchScalarGridSpec(
                num_scalar_prefetch=0,
                grid=grid,
                in_specs=in_specs,
                out_specs=out_specs,
                scratch_shapes=[
                    pltpu.VMEM((block_b, 2 * k_proj, d), jnp.float32)]),
            compiler_params=pltpu.CompilerParams(
                dimension_semantics=("parallel", "arbitrary"),
                vmem_limit_bytes=vmem_limit),
        )(x1, x, params["wq_t"], params["wk_t"], params["wv_t"],
          params["pkv_t"], params["wo_t"], params["bo"],
          jnp.asarray(seg), jnp.asarray(seg_t))

    try:
        return run(single_buffer=True)
    except Exception:
        # Fallback for JAX builds without BlockSpec(pipeline_mode=...):
        # default double-buffering (more VMEM, identical semantics).
        return run(single_buffer=False)


def _reference(x1, x, wq, wk, wv, proj_k, proj_v, wo, bo, *, heads, dim_head):
    """Pure-JAX mirror of the PyTorch forward for verification."""
    b, n, _ = x.shape
    h, dh = heads, dim_head
    hd = h * dh
    queries = x1 @ wq.T                               # (b,1,hd)
    keys = x @ wk.T                                   # (b,n,hd)
    values = x @ wv.T
    keys = jnp.einsum("bnd,nk->bkd", keys, proj_k)
    values = jnp.einsum("bnd,nk->bkd", values, proj_v)
    kproj = proj_k.shape[1]
    qh = queries.reshape(b, 1, h, dh).transpose(0, 2, 1, 3)
    kh = keys.reshape(b, kproj, h, dh).transpose(0, 2, 1, 3)
    vh = values.reshape(b, kproj, h, dh).transpose(0, 2, 1, 3)
    dots = jnp.einsum("bhnd,bhkd->bhnk", qh, kh) * dh ** (-0.5)
    attn = jax.nn.softmax(dots, axis=-1)
    out = jnp.einsum("bhnk,bhkd->bhnd", attn, vh)
    out = out.transpose(0, 2, 1, 3).reshape(b, 1, hd)
    return out @ wo.T + bo


if __name__ == "__main__":
    # Small, self-consistent shapes: dim=32, heads=4 -> dim_head=8,
    # kv seq_len = 8, Linformer k = 8, batch = 2.
    b, n, dim, heads, kproj = 2, 8, 32, 4, 8
    dim_head = dim // heads
    hd = heads * dim_head

    key = jax.random.PRNGKey(0)
    ks = jax.random.split(key, 9)

    def uni(kk, shape, std):
        return jax.random.uniform(kk, shape, jnp.float32, -std, std)

    # Deterministic parameter init (matching PyTorch init distributions).
    wq = uni(ks[0], (hd, dim), 1.0 / math.sqrt(dim))       # nn.Linear(dim, hd)
    wk = uni(ks[1], (hd, dim), 1.0 / math.sqrt(dim))
    wv = uni(ks[2], (hd, dim), 1.0 / math.sqrt(dim))
    proj_k = uni(ks[3], (n, kproj), 1.0 / math.sqrt(kproj))  # init_()
    proj_v = uni(ks[4], (n, kproj), 1.0 / math.sqrt(kproj))
    wo = uni(ks[5], (dim, hd), 1.0 / math.sqrt(hd))        # nn.Linear(hd, dim)
    bo = uni(ks[6], (dim,), 1.0 / math.sqrt(hd))

    params = dict(
        wq_t=wq.T, wk_t=wk.T, wv_t=wv.T,                       # (D, H*Dh)
        pkv_t=jnp.concatenate([proj_k.T, proj_v.T], axis=0),   # (2K, N)
        wo_t=wo.T, bo=bo.reshape(1, dim),                      # (H*Dh, D), (1, D)
    )

    x1 = jax.random.normal(ks[7], (b, 1, dim), jnp.float32)
    x = jax.random.normal(ks[8], (b, n, dim), jnp.float32)

    out = linformer_cross_attention(x1, x, params, heads=heads,
                                    dim_head=dim_head, k_proj=kproj)
    out = jax.block_until_ready(out)

    ref = _reference(x1, x, wq, wk, wv, proj_k, proj_v, wo, bo,
                     heads=heads, dim_head=dim_head)
    assert out.shape == (b, 1, dim)
    # Tolerance accounts for the (mathematically equivalent) reassociated
    # projection order and the approximate EUP reciprocal in the softmax.
    err = float(jnp.max(jnp.abs(out - ref)))
    assert err < 2e-3, f"mismatch vs reference: max abs err {err}"

    print("KERNEL_OK")
</pallas_src>

<mosaic_0001>
module attributes {stable_mosaic.version = 11 : i64} {
  func.func @_linformer_cross_attn_kernel(%arg0: i32, %arg1: i32, %arg2: memref<1x1x32xf32, #tpu.memory_space<vmem>>, %arg3: memref<1x8x32xf32, #tpu.memory_space<vmem>>, %arg4: memref<32x32xf32, #tpu.memory_space<vmem>>, %arg5: memref<32x32xf32, #tpu.memory_space<vmem>>, %arg6: memref<32x32xf32, #tpu.memory_space<vmem>>, %arg7: memref<16x8xf32, #tpu.memory_space<vmem>>, %arg8: memref<32x32xf32, #tpu.memory_space<vmem>>, %arg9: memref<1x32xf32, #tpu.memory_space<vmem>>, %arg10: memref<32x4xf32, #tpu.memory_space<vmem>>, %arg11: memref<4x32xf32, #tpu.memory_space<vmem>>, %arg12: memref<1x1x32xf32, #tpu.memory_space<vmem>>, %arg13: memref<1x16x32xf32, #tpu.memory_space<vmem>>) attributes {dimension_semantics = [#tpu.dimension_semantics<parallel>, #tpu.dimension_semantics<arbitrary>], iteration_bounds = array<i64: 2, 1>, scalar_prefetch = 0 : i64, scratch_operands = 1 : i64, tpu.core_type = #tpu.core_type<tc>, window_params = [{transform_indices = @transform_0, window_bounds = array<i64: 1, 1, 32>}, {transform_indices = @transform_1, window_bounds = array<i64: 1, 8, 32>}, {pipeline_mode = #tpu.pipeline_mode<synchronous>, transform_indices = @transform_2, window_bounds = array<i64: 32, 32>}, {pipeline_mode = #tpu.pipeline_mode<synchronous>, transform_indices = @transform_3, window_bounds = array<i64: 32, 32>}, {pipeline_mode = #tpu.pipeline_mode<synchronous>, transform_indices = @transform_4, window_bounds = array<i64: 32, 32>}, {transform_indices = @transform_5, window_bounds = array<i64: 16, 8>}, {pipeline_mode = #tpu.pipeline_mode<synchronous>, transform_indices = @transform_6, window_bounds = array<i64: 32, 32>}, {pipeline_mode = #tpu.pipeline_mode<synchronous>, transform_indices = @transform_7, window_bounds = array<i64: 1, 32>}, {pipeline_mode = #tpu.pipeline_mode<synchronous>, transform_indices = @transform_8, window_bounds = array<i64: 32, 4>}, {pipeline_mode = #tpu.pipeline_mode<synchronous>, transform_indices = @transform_9, window_bounds = array<i64: 4, 32>}, {transform_indices = @transform_10, window_bounds = array<i64: 1, 1, 32>}]} {
    %c0_i32 = arith.constant 0 : i32
    %0 = arith.cmpi eq, %arg1, %c0_i32 : i32
    %1 = arith.extui %0 : i1 to i32
    %c0_i32_0 = arith.constant 0 : i32
    %2 = arith.cmpi ne, %1, %c0_i32_0 : i32
    scf.if %2 {
      %cst_13 = arith.constant 0.000000e+00 : f32
      %16 = vector.broadcast %cst_13 : f32 to vector<1x16x32xf32>
      %c0_14 = arith.constant 0 : index
      %c0_15 = arith.constant 0 : index
      %c0_16 = arith.constant 0 : index
      %17 = vector.load %arg13[%c0_14, %c0_15, %c0_16] : memref<1x16x32xf32, #tpu.memory_space<vmem>>, vector<1x16x32xf32>
      tpu.vector_store %arg13[%c0_14, %c0_15, %c0_16], %16 {strides = array<i32>} : memref<1x16x32xf32, #tpu.memory_space<vmem>>, vector<1x16x32xf32>,
    } else {
    }
    %c0 = arith.constant 0 : index
    %c0_1 = arith.constant 0 : index
    %3 = vector.load %arg7[%c0, %c0_1] : memref<16x8xf32, #tpu.memory_space<vmem>>, vector<16x8xf32>
    %c0_2 = arith.constant 0 : index
    %c0_3 = arith.constant 0 : index
    %c0_4 = arith.constant 0 : index
    %4 = vector.load %arg13[%c0_2, %c0_3, %c0_4] : memref<1x16x32xf32, #tpu.memory_space<vmem>>, vector<1x16x32xf32>
    %5 = vector.shape_cast %4 : vector<1x16x32xf32> to vector<16x32xf32>
    %c0_5 = arith.constant 0 : index
    %c0_6 = arith.constant 0 : index
    %c0_7 = arith.constant 0 : index
    %6 = vector.load %arg3[%c0_5, %c0_6, %c0_7] : memref<1x8x32xf32, #tpu.memory_space<vmem>>, vector<1x8x32xf32>
    %7 = vector.shape_cast %6 : vector<1x8x32xf32> to vector<8x32xf32>
    %cst = arith.constant dense<0.000000e+00> : vector<16x32xf32>
    %8 = tpu.matmul %3, %7, %cst {dimension_numbers = #tpu.dot_dimension_numbers<[1], [0], [0], [1], [0, 0, 1, 1], [], []>} : vector<16x8xf32>, vector<8x32xf32>, vector<16x32xf32> -> vector<16x32xf32>
    %9 = arith.addf %5, %8 : vector<16x32xf32>
    %c0_8 = arith.constant 0 : index
    %c0_9 = arith.constant 0 : index
    %c0_10 = arith.constant 0 : index
    %10 = vector.load %arg13[%c0_8, %c0_9, %c0_10] : memref<1x16x32xf32, #tpu.memory_space<vmem>>, vector<1x16x32xf32>
    %11 = vector.shape_cast %10 : vector<1x16x32xf32> to vector<16x32xf32>
    %12 = vector.shape_cast %9 : vector<16x32xf32> to vector<1x16x32xf32>
    tpu.vector_store %arg13[%c0_8, %c0_9, %c0_10], %12 {strides = array<i32>} : memref<1x16x32xf32, #tpu.memory_space<vmem>>, vector<1x16x32xf32>,
    %c0_i32_11 = arith.constant 0 : i32
    %13 = arith.cmpi eq, %arg1, %c0_i32_11 : i32
    %14 = arith.extui %13 : i1 to i32
    %c0_i32_12 = arith.constant 0 : i32
    %15 = arith.cmpi ne, %14, %c0_i32_12 : i32
    scf.if %15 {
      %c0_13 = arith.constant 0 : index
      %c0_14 = arith.constant 0 : index
      %16 = vector.load %arg10[%c0_13, %c0_14] : memref<32x4xf32, #tpu.memory_space<vmem>>, vector<32x4xf32>
      %c0_15 = arith.constant 0 : index
      %c0_16 = arith.constant 0 : index
      %17 = vector.load %arg11[%c0_15, %c0_16] : memref<4x32xf32, #tpu.memory_space<vmem>>, vector<4x32xf32>
      %c0_17 = arith.constant 0 : index
      %c0_18 = arith.constant 0 : index
      %c0_19 = arith.constant 0 : index
      %18 = vector.load %arg2[%c0_17, %c0_18, %c0_19] : memref<1x1x32xf32, #tpu.memory_space<vmem>>, vector<1x1x32xf32>
      %19 = vector.shape_cast %18 : vector<1x1x32xf32> to vector<1x32xf32>
      %c0_20 = arith.constant 0 : index
      %c0_21 = arith.constant 0 : index
      %20 = vector.load %arg4[%c0_20, %c0_21] : memref<32x32xf32, #tpu.memory_space<vmem>>, vector<32x32xf32>
      %cst_22 = arith.constant dense<0.000000e+00> : vector<1x32xf32>
      %21 = tpu.matmul %19, %20, %cst_22 {dimension_numbers = #tpu.dot_dimension_numbers<[1], [0], [0], [1], [0, 0, 1, 1], [], []>} : vector<1x32xf32>, vector<32x32xf32>, vector<1x32xf32> -> vector<1x32xf32>
      %cst_23 = arith.constant 0.353553385 : f32
      %22 = vector.broadcast %cst_23 : f32 to vector<1x32xf32>
      %23 = arith.mulf %21, %22 : vector<1x32xf32>
      %c0_24 = arith.constant 0 : index
      %c0_25 = arith.constant 0 : index
      %c0_26 = arith.constant 0 : index
      %24 = vector.load %arg13[%c0_24, %c0_25, %c0_26] : memref<1x16x32xf32, #tpu.memory_space<vmem>>, vector<1x8x32xf32>
      %25 = vector.shape_cast %24 : vector<1x8x32xf32> to vector<8x32xf32>
      %c0_27 = arith.constant 0 : index
      %c8 = arith.constant 8 : index
      %c0_28 = arith.constant 0 : index
      %26 = vector.load %arg13[%c0_27, %c8, %c0_28] : memref<1x16x32xf32, #tpu.memory_space<vmem>>, vector<1x8x32xf32>
      %27 = vector.shape_cast %26 : vector<1x8x32xf32> to vector<8x32xf32>
      %c0_29 = arith.constant 0 : index
      %c0_30 = arith.constant 0 : index
      %28 = vector.load %arg5[%c0_29, %c0_30] : memref<32x32xf32, #tpu.memory_space<vmem>>, vector<32x32xf32>
      %cst_31 = arith.constant dense<0.000000e+00> : vector<8x32xf32>
      %29 = tpu.matmul %25, %28, %cst_31 {dimension_numbers = #tpu.dot_dimension_numbers<[1], [0], [0], [1], [0, 0, 1, 1], [], []>} : vector<8x32xf32>, vector<32x32xf32>, vector<8x32xf32> -> vector<8x32xf32>
      %c0_32 = arith.constant 0 : index
      %c0_33 = arith.constant 0 : index
      %30 = vector.load %arg6[%c0_32, %c0_33] : memref<32x32xf32, #tpu.memory_space<vmem>>, vector<32x32xf32>
      %cst_34 = arith.constant dense<0.000000e+00> : vector<8x32xf32>
      %31 = tpu.matmul %27, %30, %cst_34 {dimension_numbers = #tpu.dot_dimension_numbers<[1], [0], [0], [1], [0, 0, 1, 1], [], []>} : vector<8x32xf32>, vector<32x32xf32>, vector<8x32xf32> -> vector<8x32xf32>
      %32 = vector.shape_cast %29 : vector<8x32xf32> to vector<1x8x32xf32>
      %33 = vector.shape_cast %23 : vector<1x32xf32> to vector<1x1x32xf32>
      %34 = vector.broadcast %33 : vector<1x1x32xf32> to vector<1x8x32xf32>
      %35 = arith.mulf %32, %34 : vector<1x8x32xf32>
      %36 = vector.shape_cast %35 : vector<1x8x32xf32> to vector<8x32xf32>
      %cst_35 = arith.constant dense<0.000000e+00> : vector<8x4xf32>
      %37 = tpu.matmul %36, %16, %cst_35 {dimension_numbers = #tpu.dot_dimension_numbers<[1], [0], [0], [1], [0, 0, 1, 1], [], []>} : vector<8x32xf32>, vector<32x4xf32>, vector<8x4xf32> -> vector<8x4xf32>
      %38 = vector.shape_cast %37 : vector<8x4xf32> to vector<1x8x4xf32>
      %cst_36 = arith.constant dense<0xFF800000> : vector<1x4xf32>
      %39 = vector.multi_reduction <maximumf>, %38, %cst_36 [1] : vector<1x8x4xf32> to vector<1x4xf32>
      %40 = vector.shape_cast %39 : vector<1x4xf32> to vector<1x1x4xf32>
      %41 = vector.broadcast %40 : vector<1x1x4xf32> to vector<1x8x4xf32>
      %42 = arith.subf %38, %41 : vector<1x8x4xf32>
      %43 = math.exp %42 : vector<1x8x4xf32>
      %cst_37 = arith.constant dense<0.000000e+00> : vector<1x4xf32>
      %44 = vector.multi_reduction <add>, %43, %cst_37 [1] : vector<1x8x4xf32> to vector<1x4xf32>
      %45 = vector.shape_cast %44 : vector<1x4xf32> to vector<1x1x4xf32>
      %46 = tpu.reciprocal %45 {approx = true} : vector<1x1x4xf32> -> vector<1x1x4xf32>
      %47 = vector.broadcast %46 : vector<1x1x4xf32> to vector<1x8x4xf32>
      %48 = arith.mulf %43, %47 : vector<1x8x4xf32>
      %49 = vector.shape_cast %48 : vector<1x8x4xf32> to vector<8x4xf32>
      %cst_38 = arith.constant dense<0.000000e+00> : vector<8x32xf32>
      %50 = tpu.matmul %49, %17, %cst_38 {dimension_numbers = #tpu.dot_dimension_numbers<[1], [0], [0], [1], [0, 0, 1, 1], [], []>} : vector<8x4xf32>, vector<4x32xf32>, vector<8x32xf32> -> vector<8x32xf32>
      %51 = vector.shape_cast %50 : vector<8x32xf32> to vector<1x8x32xf32>
      %52 = vector.shape_cast %31 : vector<8x32xf32> to vector<1x8x32xf32>
      %53 = arith.mulf %51, %52 : vector<1x8x32xf32>
      %cst_39 = arith.constant dense<0.000000e+00> : vector<1x32xf32>
      %54 = vector.multi_reduction <add>, %53, %cst_39 [1] : vector<1x8x32xf32> to vector<1x32xf32>
      %c0_40 = arith.constant 0 : index
      %c0_41 = arith.constant 0 : index
      %55 = vector.load %arg8[%c0_40, %c0_41] : memref<32x32xf32, #tpu.memory_space<vmem>>, vector<32x32xf32>
      %cst_42 = arith.constant dense<0.000000e+00> : vector<1x32xf32>
      %56 = tpu.matmul %54, %55, %cst_42 {dimension_numbers = #tpu.dot_dimension_numbers<[1], [0], [0], [1], [0, 0, 1, 1], [], []>} : vector<1x32xf32>, vector<32x32xf32>, vector<1x32xf32> -> vector<1x32xf32>
      %c0_43 = arith.constant 0 : index
      %c0_44 = arith.constant 0 : index
      %57 = vector.load %arg9[%c0_43, %c0_44] : memref<1x32xf32, #tpu.memory_space<vmem>>, vector<1x32xf32>
      %58 = arith.addf %56, %57 : vector<1x32xf32>
      %c0_45 = arith.constant 0 : index
      %c0_46 = arith.constant 0 : index
      %c0_47 = arith.constant 0 : index
      %59 = vector.load %arg12[%c0_45, %c0_46, %c0_47] : memref<1x1x32xf32, #tpu.memory_space<vmem>>, vector<1x1x32xf32>
      %60 = vector.shape_cast %59 : vector<1x1x32xf32> to vector<1x32xf32>
      %61 = vector.shape_cast %58 : vector<1x32xf32> to vector<1x1x32xf32>
      tpu.vector_store %arg12[%c0_45, %c0_46, %c0_47], %61 {strides = array<i32>} : memref<1x1x32xf32, #tpu.memory_space<vmem>>, vector<1x1x32xf32>,
    } else {
    }
    return
  }
  func.func @transform_0(%arg0: i32, %arg1: i32) -> (i32, i32, i32) {
    %c0_i32 = arith.constant 0 : i32
    %c0_i32_0 = arith.constant 0 : i32
    %c0_i32_1 = arith.constant 0 : i32
    return %arg0, %c0_i32, %c0_i32_0 : i32, i32, i32
  }
  func.func @transform_1(%arg0: i32, %arg1: i32) -> (i32, i32, i32) {
    %c0_i32 = arith.constant 0 : i32
    %c0_i32_0 = arith.constant 0 : i32
    return %arg0, %arg1, %c0_i32 : i32, i32, i32
  }
  func.func @transform_2(%arg0: i32, %arg1: i32) -> (i32, i32) {
    %c0_i32 = arith.constant 0 : i32
    %c0_i32_0 = arith.constant 0 : i32
    %c0_i32_1 = arith.constant 0 : i32
    return %c0_i32, %c0_i32_0 : i32, i32
  }
  func.func @transform_3(%arg0: i32, %arg1: i32) -> (i32, i32) {
    %c0_i32 = arith.constant 0 : i32
    %c0_i32_0 = arith.constant 0 : i32
    %c0_i32_1 = arith.constant 0 : i32
    return %c0_i32, %c0_i32_0 : i32, i32
  }
  func.func @transform_4(%arg0: i32, %arg1: i32) -> (i32, i32) {
    %c0_i32 = arith.constant 0 : i32
    %c0_i32_0 = arith.constant 0 : i32
    %c0_i32_1 = arith.constant 0 : i32
    return %c0_i32, %c0_i32_0 : i32, i32
  }
  func.func @transform_5(%arg0: i32, %arg1: i32) -> (i32, i32) {
    %c0_i32 = arith.constant 0 : i32
    %c0_i32_0 = arith.constant 0 : i32
    return %c0_i32, %arg1 : i32, i32
  }
  func.func @transform_6(%arg0: i32, %arg1: i32) -> (i32, i32) {
    %c0_i32 = arith.constant 0 : i32
    %c0_i32_0 = arith.constant 0 : i32
    %c0_i32_1 = arith.constant 0 : i32
    return %c0_i32, %c0_i32_0 : i32, i32
  }
  func.func @transform_7(%arg0: i32, %arg1: i32) -> (i32, i32) {
    %c0_i32 = arith.constant 0 : i32
    %c0_i32_0 = arith.constant 0 : i32
    %c0_i32_1 = arith.constant 0 : i32
    return %c0_i32, %c0_i32_0 : i32, i32
  }
  func.func @transform_8(%arg0: i32, %arg1: i32) -> (i32, i32) {
    %c0_i32 = arith.constant 0 : i32
    %c0_i32_0 = arith.constant 0 : i32
    %c0_i32_1 = arith.constant 0 : i32
    return %c0_i32, %c0_i32_0 : i32, i32
  }
  func.func @transform_9(%arg0: i32, %arg1: i32) -> (i32, i32) {
    %c0_i32 = arith.constant 0 : i32
    %c0_i32_0 = arith.constant 0 : i32
    %c0_i32_1 = arith.constant 0 : i32
    return %c0_i32, %c0_i32_0 : i32, i32
  }
  func.func @transform_10(%arg0: i32, %arg1: i32) -> (i32, i32, i32) {
    %c0_i32 = arith.constant 0 : i32
    %c0_i32_0 = arith.constant 0 : i32
    %c0_i32_1 = arith.constant 0 : i32
    return %arg0, %c0_i32, %c0_i32_0 : i32, i32, i32
  }
}

module attributes {stable_mosaic.version = 11 : i64} {
  func.func @_linformer_cross_attn_kernel(%arg0: i32, %arg1: i32, %arg2: memref<1x1x32xf32, #tpu.memory_space<vmem>>, %arg3: memref<1x8x32xf32, #tpu.memory_space<vmem>>, %arg4: memref<32x32xf32, #tpu.memory_space<vmem>>, %arg5: memref<32x32xf32, #tpu.memory_space<vmem>>, %arg6: memref<32x32xf32, #tpu.memory_space<vmem>>, %arg7: memref<16x8xf32, #tpu.memory_space<vmem>>, %arg8: memref<32x32xf32, #tpu.memory_space<vmem>>, %arg9: memref<1x32xf32, #tpu.memory_space<vmem>>, %arg10: memref<32x4xf32, #tpu.memory_space<vmem>>, %arg11: memref<4x32xf32, #tpu.memory_space<vmem>>, %arg12: memref<1x1x32xf32, #tpu.memory_space<vmem>>, %arg13: memref<1x16x32xf32, #tpu.memory_space<vmem>>) attributes {dimension_semantics = [#tpu.dimension_semantics<parallel>, #tpu.dimension_semantics<arbitrary>], iteration_bounds = array<i64: 2, 1>, scalar_prefetch = 0 : i64, scratch_operands = 1 : i64, tpu.core_type = #tpu.core_type<tc>, window_params = [{transform_indices = @transform_0, window_bounds = array<i64: 1, 1, 32>}, {transform_indices = @transform_1, window_bounds = array<i64: 1, 8, 32>}, {pipeline_mode = #tpu.pipeline_mode<synchronous>, transform_indices = @transform_2, window_bounds = array<i64: 32, 32>}, {pipeline_mode = #tpu.pipeline_mode<synchronous>, transform_indices = @transform_3, window_bounds = array<i64: 32, 32>}, {pipeline_mode = #tpu.pipeline_mode<synchronous>, transform_indices = @transform_4, window_bounds = array<i64: 32, 32>}, {transform_indices = @transform_5, window_bounds = array<i64: 16, 8>}, {pipeline_mode = #tpu.pipeline_mode<synchronous>, transform_indices = @transform_6, window_bounds = array<i64: 32, 32>}, {pipeline_mode = #tpu.pipeline_mode<synchronous>, transform_indices = @transform_7, window_bounds = array<i64: 1, 32>}, {pipeline_mode = #tpu.pipeline_mode<synchronous>, transform_indices = @transform_8, window_bounds = array<i64: 32, 4>}, {pipeline_mode = #tpu.pipeline_mode<synchronous>, transform_indices = @transform_9, window_bounds = array<i64: 4, 32>}, {transform_indices = @transform_10, window_bounds = array<i64: 1, 1, 32>}]} {
    %c0_i32 = arith.constant 0 : i32
    %0 = arith.cmpi eq, %arg1, %c0_i32 : i32
    %1 = arith.extui %0 : i1 to i32
    %c0_i32_0 = arith.constant 0 : i32
    %2 = arith.cmpi ne, %1, %c0_i32_0 : i32
    scf.if %2 {
      %cst_13 = arith.constant 0.000000e+00 : f32
      %16 = vector.broadcast %cst_13 : f32 to vector<1x16x32xf32>
      %c0_14 = arith.constant 0 : index
      %c0_15 = arith.constant 0 : index
      %c0_16 = arith.constant 0 : index
      %17 = vector.load %arg13[%c0_14, %c0_15, %c0_16] : memref<1x16x32xf32, #tpu.memory_space<vmem>>, vector<1x16x32xf32>
      tpu.vector_store %arg13[%c0_14, %c0_15, %c0_16], %16 {strides = array<i32>} : memref<1x16x32xf32, #tpu.memory_space<vmem>>, vector<1x16x32xf32>,
    } else {
    }
    %c0 = arith.constant 0 : index
    %c0_1 = arith.constant 0 : index
    %3 = vector.load %arg7[%c0, %c0_1] : memref<16x8xf32, #tpu.memory_space<vmem>>, vector<16x8xf32>
    %c0_2 = arith.constant 0 : index
    %c0_3 = arith.constant 0 : index
    %c0_4 = arith.constant 0 : index
    %4 = vector.load %arg13[%c0_2, %c0_3, %c0_4] : memref<1x16x32xf32, #tpu.memory_space<vmem>>, vector<1x16x32xf32>
    %5 = vector.shape_cast %4 : vector<1x16x32xf32> to vector<16x32xf32>
    %c0_5 = arith.constant 0 : index
    %c0_6 = arith.constant 0 : index
    %c0_7 = arith.constant 0 : index
    %6 = vector.load %arg3[%c0_5, %c0_6, %c0_7] : memref<1x8x32xf32, #tpu.memory_space<vmem>>, vector<1x8x32xf32>
    %7 = vector.shape_cast %6 : vector<1x8x32xf32> to vector<8x32xf32>
    %cst = arith.constant dense<0.000000e+00> : vector<16x32xf32>
    %8 = tpu.matmul %3, %7, %cst {dimension_numbers = #tpu.dot_dimension_numbers<[1], [0], [0], [1], [0, 0, 1, 1], [], []>} : vector<16x8xf32>, vector<8x32xf32>, vector<16x32xf32> -> vector<16x32xf32>
    %9 = arith.addf %5, %8 : vector<16x32xf32>
    %c0_8 = arith.constant 0 : index
    %c0_9 = arith.constant 0 : index
    %c0_10 = arith.constant 0 : index
    %10 = vector.load %arg13[%c0_8, %c0_9, %c0_10] : memref<1x16x32xf32, #tpu.memory_space<vmem>>, vector<1x16x32xf32>
    %11 = vector.shape_cast %10 : vector<1x16x32xf32> to vector<16x32xf32>
    %12 = vector.shape_cast %9 : vector<16x32xf32> to vector<1x16x32xf32>
    tpu.vector_store %arg13[%c0_8, %c0_9, %c0_10], %12 {strides = array<i32>} : memref<1x16x32xf32, #tpu.memory_space<vmem>>, vector<1x16x32xf32>,
    %c0_i32_11 = arith.constant 0 : i32
    %13 = arith.cmpi eq, %arg1, %c0_i32_11 : i32
    %14 = arith.extui %13 : i1 to i32
    %c0_i32_12 = arith.constant 0 : i32
    %15 = arith.cmpi ne, %14, %c0_i32_12 : i32
    scf.if %15 {
      %c0_13 = arith.constant 0 : index
      %c0_14 = arith.constant 0 : index
      %16 = vector.load %arg10[%c0_13, %c0_14] : memref<32x4xf32, #tpu.memory_space<vmem>>, vector<32x4xf32>
      %c0_15 = arith.constant 0 : index
      %c0_16 = arith.constant 0 : index
      %17 = vector.load %arg11[%c0_15, %c0_16] : memref<4x32xf32, #tpu.memory_space<vmem>>, vector<4x32xf32>
      %c0_17 = arith.constant 0 : index
      %c0_18 = arith.constant 0 : index
      %c0_19 = arith.constant 0 : index
      %18 = vector.load %arg2[%c0_17, %c0_18, %c0_19] : memref<1x1x32xf32, #tpu.memory_space<vmem>>, vector<1x1x32xf32>
      %19 = vector.shape_cast %18 : vector<1x1x32xf32> to vector<1x32xf32>
      %c0_20 = arith.constant 0 : index
      %c0_21 = arith.constant 0 : index
      %20 = vector.load %arg4[%c0_20, %c0_21] : memref<32x32xf32, #tpu.memory_space<vmem>>, vector<32x32xf32>
      %cst_22 = arith.constant dense<0.000000e+00> : vector<1x32xf32>
      %21 = tpu.matmul %19, %20, %cst_22 {dimension_numbers = #tpu.dot_dimension_numbers<[1], [0], [0], [1], [0, 0, 1, 1], [], []>} : vector<1x32xf32>, vector<32x32xf32>, vector<1x32xf32> -> vector<1x32xf32>
      %cst_23 = arith.constant 0.353553385 : f32
      %22 = vector.broadcast %cst_23 : f32 to vector<1x32xf32>
      %23 = arith.mulf %21, %22 : vector<1x32xf32>
      %c0_24 = arith.constant 0 : index
      %c0_25 = arith.constant 0 : index
      %c0_26 = arith.constant 0 : index
      %24 = vector.load %arg13[%c0_24, %c0_25, %c0_26] : memref<1x16x32xf32, #tpu.memory_space<vmem>>, vector<1x8x32xf32>
      %25 = vector.shape_cast %24 : vector<1x8x32xf32> to vector<8x32xf32>
      %c0_27 = arith.constant 0 : index
      %c8 = arith.constant 8 : index
      %c0_28 = arith.constant 0 : index
      %26 = vector.load %arg13[%c0_27, %c8, %c0_28] : memref<1x16x32xf32, #tpu.memory_space<vmem>>, vector<1x8x32xf32>
      %27 = vector.shape_cast %26 : vector<1x8x32xf32> to vector<8x32xf32>
      %c0_29 = arith.constant 0 : index
      %c0_30 = arith.constant 0 : index
      %28 = vector.load %arg5[%c0_29, %c0_30] : memref<32x32xf32, #tpu.memory_space<vmem>>, vector<32x32xf32>
      %cst_31 = arith.constant dense<0.000000e+00> : vector<8x32xf32>
      %29 = tpu.matmul %25, %28, %cst_31 {dimension_numbers = #tpu.dot_dimension_numbers<[1], [0], [0], [1], [0, 0, 1, 1], [], []>} : vector<8x32xf32>, vector<32x32xf32>, vector<8x32xf32> -> vector<8x32xf32>
      %c0_32 = arith.constant 0 : index
      %c0_33 = arith.constant 0 : index
      %30 = vector.load %arg6[%c0_32, %c0_33] : memref<32x32xf32, #tpu.memory_space<vmem>>, vector<32x32xf32>
      %cst_34 = arith.constant dense<0.000000e+00> : vector<8x32xf32>
      %31 = tpu.matmul %27, %30, %cst_34 {dimension_numbers = #tpu.dot_dimension_numbers<[1], [0], [0], [1], [0, 0, 1, 1], [], []>} : vector<8x32xf32>, vector<32x32xf32>, vector<8x32xf32> -> vector<8x32xf32>
      %32 = vector.shape_cast %29 : vector<8x32xf32> to vector<1x8x32xf32>
      %33 = vector.shape_cast %23 : vector<1x32xf32> to vector<1x1x32xf32>
      %34 = vector.broadcast %33 : vector<1x1x32xf32> to vector<1x8x32xf32>
      %35 = arith.mulf %32, %34 : vector<1x8x32xf32>
      %36 = vector.shape_cast %35 : vector<1x8x32xf32> to vector<8x32xf32>
      %cst_35 = arith.constant dense<0.000000e+00> : vector<8x4xf32>
      %37 = tpu.matmul %36, %16, %cst_35 {dimension_numbers = #tpu.dot_dimension_numbers<[1], [0], [0], [1], [0, 0, 1, 1], [], []>} : vector<8x32xf32>, vector<32x4xf32>, vector<8x4xf32> -> vector<8x4xf32>
      %38 = vector.shape_cast %37 : vector<8x4xf32> to vector<1x8x4xf32>
      %cst_36 = arith.constant dense<0xFF800000> : vector<1x4xf32>
      %39 = vector.multi_reduction <maximumf>, %38, %cst_36 [1] : vector<1x8x4xf32> to vector<1x4xf32>
      %40 = vector.shape_cast %39 : vector<1x4xf32> to vector<1x1x4xf32>
      %41 = vector.broadcast %40 : vector<1x1x4xf32> to vector<1x8x4xf32>
      %42 = arith.subf %38, %41 : vector<1x8x4xf32>
      %43 = math.exp %42 : vector<1x8x4xf32>
      %cst_37 = arith.constant dense<0.000000e+00> : vector<1x4xf32>
      %44 = vector.multi_reduction <add>, %43, %cst_37 [1] : vector<1x8x4xf32> to vector<1x4xf32>
      %45 = vector.shape_cast %44 : vector<1x4xf32> to vector<1x1x4xf32>
      %46 = tpu.reciprocal %45 {approx = true} : vector<1x1x4xf32> -> vector<1x1x4xf32>
      %47 = vector.broadcast %46 : vector<1x1x4xf32> to vector<1x8x4xf32>
      %48 = arith.mulf %43, %47 : vector<1x8x4xf32>
      %49 = vector.shape_cast %48 : vector<1x8x4xf32> to vector<8x4xf32>
      %cst_38 = arith.constant dense<0.000000e+00> : vector<8x32xf32>
      %50 = tpu.matmul %49, %17, %cst_38 {dimension_numbers = #tpu.dot_dimension_numbers<[1], [0], [0], [1], [0, 0, 1, 1], [], []>} : vector<8x4xf32>, vector<4x32xf32>, vector<8x32xf32> -> vector<8x32xf32>
      %51 = vector.shape_cast %50 : vector<8x32xf32> to vector<1x8x32xf32>
      %52 = vector.shape_cast %31 : vector<8x32xf32> to vector<1x8x32xf32>
      %53 = arith.mulf %51, %52 : vector<1x8x32xf32>
      %cst_39 = arith.constant dense<0.000000e+00> : vector<1x32xf32>
      %54 = vector.multi_reduction <add>, %53, %cst_39 [1] : vector<1x8x32xf32> to vector<1x32xf32>
      %c0_40 = arith.constant 0 : index
      %c0_41 = arith.constant 0 : index
      %55 = vector.load %arg8[%c0_40, %c0_41] : memref<32x32xf32, #tpu.memory_space<vmem>>, vector<32x32xf32>
      %cst_42 = arith.constant dense<0.000000e+00> : vector<1x32xf32>
      %56 = tpu.matmul %54, %55, %cst_42 {dimension_numbers = #tpu.dot_dimension_numbers<[1], [0], [0], [1], [0, 0, 1, 1], [], []>} : vector<1x32xf32>, vector<32x32xf32>, vector<1x32xf32> -> vector<1x32xf32>
      %c0_43 = arith.constant 0 : index
      %c0_44 = arith.constant 0 : index
      %57 = vector.load %arg9[%c0_43, %c0_44] : memref<1x32xf32, #tpu.memory_space<vmem>>, vector<1x32xf32>
      %58 = arith.addf %56, %57 : vector<1x32xf32>
      %c0_45 = arith.constant 0 : index
      %c0_46 = arith.constant 0 : index
      %c0_47 = arith.constant 0 : index
      %59 = vector.load %arg12[%c0_45, %c0_46, %c0_47] : memref<1x1x32xf32, #tpu.memory_space<vmem>>, vector<1x1x32xf32>
      %60 = vector.shape_cast %59 : vector<1x1x32xf32> to vector<1x32xf32>
      %61 = vector.shape_cast %58 : vector<1x32xf32> to vector<1x1x32xf32>
      tpu.vector_store %arg12[%c0_45, %c0_46, %c0_47], %61 {strides = array<i32>} : memref<1x1x32xf32, #tpu.memory_space<vmem>>, vector<1x1x32xf32>,
    } else {
    }
    return
  }
  func.func @transform_0(%arg0: i32, %arg1: i32) -> (i32, i32, i32) {
    %c0_i32 = arith.constant 0 : i32
    %c0_i32_0 = arith.constant 0 : i32
    %c0_i32_1 = arith.constant 0 : i32
    return %arg0, %c0_i32, %c0_i32_0 : i32, i32, i32
  }
  func.func @transform_1(%arg0: i32, %arg1: i32) -> (i32, i32, i32) {
    %c0_i32 = arith.constant 0 : i32
    %c0_i32_0 = arith.constant 0 : i32
    return %arg0, %arg1, %c0_i32 : i32, i32, i32
  }
  func.func @transform_2(%arg0: i32, %arg1: i32) -> (i32, i32) {
    %c0_i32 = arith.constant 0 : i32
    %c0_i32_0 = arith.constant 0 : i32
    %c0_i32_1 = arith.constant 0 : i32
    return %c0_i32, %c0_i32_0 : i32, i32
  }
  func.func @transform_3(%arg0: i32, %arg1: i32) -> (i32, i32) {
    %c0_i32 = arith.constant 0 : i32
    %c0_i32_0 = arith.constant 0 : i32
    %c0_i32_1 = arith.constant 0 : i32
    return %c0_i32, %c0_i32_0 : i32, i32
  }
  func.func @transform_4(%arg0: i32, %arg1: i32) -> (i32, i32) {
    %c0_i32 = arith.constant 0 : i32
    %c0_i32_0 = arith.constant 0 : i32
    %c0_i32_1 = arith.constant 0 : i32
    return %c0_i32, %c0_i32_0 : i32, i32
  }
  func.func @transform_5(%arg0: i32, %arg1: i32) -> (i32, i32) {
    %c0_i32 = arith.constant 0 : i32
    %c0_i32_0 = arith.constant 0 : i32
    return %c0_i32, %arg1 : i32, i32
  }
  func.func @transform_6(%arg0: i32, %arg1: i32) -> (i32, i32) {
    %c0_i32 = arith.constant 0 : i32
    %c0_i32_0 = arith.constant 0 : i32
    %c0_i32_1 = arith.constant 0 : i32
    return %c0_i32, %c0_i32_0 : i32, i32
  }
  func.func @transform_7(%arg0: i32, %arg1: i32) -> (i32, i32) {
    %c0_i32 = arith.constant 0 : i32
    %c0_i32_0 = arith.constant 0 : i32
    %c0_i32_1 = arith.constant 0 : i32
    return %c0_i32, %c0_i32_0 : i32, i32
  }
  func.func @transform_8(%arg0: i32, %arg1: i32) -> (i32, i32) {
    %c0_i32 = arith.constant 0 : i32
    %c0_i32_0 = arith.constant 0 : i32
    %c0_i32_1 = arith.constant 0 : i32
    return %c0_i32, %c0_i32_0 : i32, i32
  }
  func.func @transform_9(%arg0: i32, %arg1: i32) -> (i32, i32) {
    %c0_i32 = arith.constant 0 : i32
    %c0_i32_0 = arith.constant 0 : i32
    %c0_i32_1 = arith.constant 0 : i32
    return %c0_i32, %c0_i32_0 : i32, i32
  }
  func.func @transform_10(%arg0: i32, %arg1: i32) -> (i32, i32, i32) {
    %c0_i32 = arith.constant 0 : i32
    %c0_i32_0 = arith.constant 0 : i32
    %c0_i32_1 = arith.constant 0 : i32
    return %arg0, %c0_i32, %c0_i32_0 : i32, i32, i32
  }
}

</mosaic_0001>

<llo_original>
// kernel: tpu_custom_call.1
$region0: #{tpu_custom_call.1}
  #allocation0 [shape = 'u32[]', space=smem, size = 0x4, offset = 0x4, fixed_abs, tag = 'smem constant byte address 0x4 - core index']
  #allocation1 [shape = 'u32[144,128]{1,0:T(1,128)}', space=vmem, size = 0x12000, scoped, tag = 'internal scratch']
  #allocation2 [shape = 'f32[1,16,32]{2,1,0:T(8,128)}', space=vmem, size = 0x2000, scoped, tag = 'scratch operand']
  %s0 = inlined_call_operand.hbm [shape: f32[2,1,32], index: 0, kind: input, shape index: {}]
  %s1 = inlined_call_operand.hbm [shape: f32[2,8,32], index: 1, kind: input, shape index: {}]
  %s2 = inlined_call_operand.vmem [shape: f32[32,32], index: 2, kind: input, shape index: {}]
  %s3 = inlined_call_operand.vmem [shape: f32[32,32], index: 3, kind: input, shape index: {}]
  %s4 = inlined_call_operand.hbm [shape: f32[32,32], index: 4, kind: input, shape index: {}]
  %s5 = inlined_call_operand.vmem [shape: f32[16,8], index: 5, kind: input, shape index: {}]
  %s6 = inlined_call_operand.hbm [shape: f32[32,32], index: 6, kind: input, shape index: {}]
  %s7 = inlined_call_operand.hbm [shape: f32[1,32], index: 7, kind: input, shape index: {}]
  %s8 = inlined_call_operand.vmem [shape: f32[32,4], index: 8, kind: input, shape index: {}]
  %s9 = inlined_call_operand.vmem [shape: f32[4,32], index: 9, kind: input, shape index: {}]
  %s10 = inlined_call_operand.hbm [shape: f32[2,1,32], index: 10, kind: output, shape index: {}]
  %s11 = sld [smem:[#allocation0]]
  $region101: #{tpu_custom_call.1} parent=0
    _
  %s13 = ssub.s32 1, %s11
  %s14 = scalar_select 0, %s13, %s11
  $region1: #{tpu_custom_call.1} parent=0
    #allocation3 [shape = 'u8[1024]{0}', space=vmem, size = 0x400, scoped, tag = 'input window, operand 0']
    #allocation4 [shape = 's32[2]{0}', space=sflag, size = 0x8, scoped, tag = 'scoped memory for tpu_custom_call.1']
    #allocation5 [shape = 's32[2]{0}', space=sflag, size = 0x8, scoped, tag = 'scoped memory for tpu_custom_call.1']
    #allocation6 [shape = 'u8[8192]{0}', space=vmem, size = 0x2000, scoped, tag = 'input window, operand 1']
    #allocation7 [shape = 's32[2]{0}', space=sflag, size = 0x8, scoped, tag = 'scoped memory for tpu_custom_call.1']
    #allocation8 [shape = 'u8[16384]{0}', space=vmem, size = 0x4000, scoped, tag = 'input window, operand 4, single buffered']
    #allocation9 [shape = 'u8[16384]{0}', space=vmem, size = 0x4000, scoped, tag = 'input window, operand 6, single buffered']
    #allocation10 [shape = 's32[1]{0}', space=sflag, size = 0x4, scoped, tag = 'scoped memory for tpu_custom_call.1']
    #allocation11 [shape = 'u8[512]{0}', space=vmem, size = 0x400, scoped, tag = 'input window, operand 7, single buffered']
    #allocation12 [shape = 'u8[1024]{0}', space=vmem, size = 0x400, scoped, tag = 'output window, operand 0']
    %15 = vsyncpa [#allocation4], 0
    %s16 = scalar_lea.sflag [#allocation4], 1
    %17 = vsyncpa %s16, 0
    %18 = vsyncpa [#allocation7], 0
    %s19 = scalar_lea.sflag [#allocation7], 1
    %20 = vsyncpa %s19, 0
    %21 = vsyncpa [#allocation10], 0
    %22 = vsyncpa [#allocation5], 0
    %s23 = scalar_lea.sflag [#allocation5], 1
    %24 = vsyncpa %s23, 0
    loop: start=0, step=1, limit=4
    $region2: #{tpu_custom_call.1} parent=1 // loop_pre_header
      _
    $region3: #{tpu_custom_call.1} parent=1 // loop_header
      %s26 = sphi 0, %s30
      %p27 = scmp.ge.s32.totalorder %s26, 4
      %s33 = sphi 0, %s45
      %s34 = sphi 0, %s41
      %s35 = sphi 0, %s33
      %s36 = sphi 0, %s34
      %s37 = sphi 0, %s35
      %s38 = sphi 0, %s36
      %s48 = sphi 0, %s50
      %s51 = sphi 0, %s48
      %s52 = sphi 0, %s51
      %s68 = sphi 0, %s52
      %s76 = sphi 0, %s78
      %s79 = sphi 0, %s76
      %s80 = sphi 0, %s79
      %s96 = sphi 0, %s80
      %s100 = sphi 0, %s100
      %s102 = sphi 0, %s100
      %s103 = sphi 0, %s102
      %s117 = sphi 0, %s103
      %s121 = sphi 0, %s121
      %s123 = sphi 0, %s121
      %s124 = sphi 0, %s123
      %s138 = sphi 0, %s124
      %s142 = sphi 0, %s142
      %s144 = sphi 0, %s142
      %s145 = sphi 0, %s144
      %s159 = sphi 0, %s145
      %s165 = sphi 0, %s167
      %s168 = sphi 0, %s165
      %s169 = sphi 0, %s168
      %s185 = sphi 0, %s169
      %s189 = sphi 0, %s189
      %s191 = sphi 0, %s189
      %s192 = sphi 0, %s191
      %s206 = sphi 0, %s192
      %s210 = sphi 0, %s210
      %s212 = sphi 0, %s210
      %s213 = sphi 0, %s212
      %s227 = sphi 0, %s213
      %s231 = sphi 0, %s231
      %s233 = sphi 0, %s231
      %s234 = sphi 0, %s233
      %s248 = sphi 0, %s234
      %s252 = sphi 0, %s252
      %s254 = sphi 0, %s252
      %s255 = sphi 0, %s254
      %s269 = sphi 0, %s255
      %s275 = sphi 0, %s277
      %s278 = sphi 0, %s275
      %s279 = sphi 0, %s278
      %s295 = sphi 0, %s279
    $region4: #{tpu_custom_call.1} parent=1 // loop_header_branch
      %29 = sbr.rel (%p27) target = $region8
    $region5: #{tpu_custom_call.1} parent=1 // loop_body
      %s31 = ssub.s32 %s26, 1
      %s32 = ssub.s32 %s26, 2
      %s39 = sadd.s32 1, %s34
      %p40 = scmp.ge.s32.totalorder %s39, 1
      %s41 = scalar_select %p40, 0, %s39
      %s42 = sadd.s32 1, %s33
      %s43 = scalar_select %p40, %s42, %s33
      %p44 = scmp.ge.s32.totalorder %s43, 2
      %s45 = scalar_select %p44, 0, %s43
      %s46 = ssub.s32 %s33, %s45
      %p47 = scmp.eq.s32.totalorder %s46, 0
      %s49 = sadd.s32 %s48, 1
      %s50 = scalar_select %p47, %s48, %s49
      %p53 = pneg %p47
      %p54 = scmp.eq.s32.totalorder %s26, 1
      %p55 = por %p53, %p54
      %p56 = scmp.ne.s32.totalorder %s48, %s51
      %p57 = scmp.eq.s32.totalorder %s26, 0
      %p58 = por %p56, %p57
      %p59 = scmp.ne.s32.totalorder %s48, %s51
      %p60 = scmp.eq.s32.totalorder %s31, 1
      %p61 = por %p59, %p60
      %p62 = scmp.ne.s32.totalorder %s51, %s52
      %p63 = scmp.eq.s32.totalorder %s31, 0
      %p64 = por %p62, %p63
      %p65 = scmp.ne.s32.totalorder %s51, %s52
      %p66 = scmp.eq.s32.totalorder %s32, 1
      %p67 = por %p65, %p66
      %p69 = scmp.ne.s32.totalorder %s52, %s68
      %p70 = scmp.eq.s32.totalorder %s32, 0
      %p71 = por %p69, %p70
      %s72 = ssub.s32 %s33, %s45
      %s73 = ssub.s32 %s34, %s41
      %s74 = sor.u32 %s72, %s73
      %p75 = scmp.eq.s32.totalorder %s74, 0
      %s77 = sadd.s32 %s76, 1
      %s78 = scalar_select %p75, %s76, %s77
      %p81 = pneg %p75
      %p82 = scmp.eq.s32.totalorder %s26, 1
      %p83 = por %p81, %p82
      %p84 = scmp.ne.s32.totalorder %s76, %s79
      %p85 = scmp.eq.s32.totalorder %s26, 0
      %p86 = por %p84, %p85
      %p87 = scmp.ne.s32.totalorder %s76, %s79
      %p88 = scmp.eq.s32.totalorder %s31, 1
      %p89 = por %p87, %p88
      %p90 = scmp.ne.s32.totalorder %s79, %s80
      %p91 = scmp.eq.s32.totalorder %s31, 0
      %p92 = por %p90, %p91
      %p93 = scmp.ne.s32.totalorder %s79, %s80
      %p94 = scmp.eq.s32.totalorder %s32, 1
      %p95 = por %p93, %p94
      %p97 = scmp.ne.s32.totalorder %s80, %s96
      %p98 = scmp.eq.s32.totalorder %s32, 0
      %p99 = por %p97, %p98
      %s101 = sadd.s32 %s100, 1
      %p104 = scmp.eq.s32.totalorder %s26, 1
      %p105 = scmp.ne.s32.totalorder %s100, %s102
      %p106 = scmp.eq.s32.totalorder %s26, 0
      %p107 = por %p105, %p106
      %p108 = scmp.ne.s32.totalorder %s100, %s102
      %p109 = scmp.eq.s32.totalorder %s31, 1
      %p110 = por %p108, %p109
      %p111 = scmp.ne.s32.totalorder %s102, %s103
      %p112 = scmp.eq.s32.totalorder %s31, 0
      %p113 = por %p111, %p112
      %p114 = scmp.ne.s32.totalorder %s102, %s103
      %p115 = scmp.eq.s32.totalorder %s32, 1
      %p116 = por %p114, %p115
      %p118 = scmp.ne.s32.totalorder %s103, %s117
      %p119 = scmp.eq.s32.totalorder %s32, 0
      %p120 = por %p118, %p119
      %s122 = sadd.s32 %s121, 1
      %p125 = scmp.eq.s32.totalorder %s26, 1
      %p126 = scmp.ne.s32.totalorder %s121, %s123
      %p127 = scmp.eq.s32.totalorder %s26, 0
      %p128 = por %p126, %p127
      %p129 = scmp.ne.s32.totalorder %s121, %s123
      %p130 = scmp.eq.s32.totalorder %s31, 1
      %p131 = por %p129, %p130
      %p132 = scmp.ne.s32.totalorder %s123, %s124
      %p133 = scmp.eq.s32.totalorder %s31, 0
      %p134 = por %p132, %p133
      %p135 = scmp.ne.s32.totalorder %s123, %s124
      %p136 = scmp.eq.s32.totalorder %s32, 1
      %p137 = por %p135, %p136
      %p139 = scmp.ne.s32.totalorder %s124, %s138
      %p140 = scmp.eq.s32.totalorder %s32, 0
      %p141 = por %p139, %p140
      %s143 = sadd.s32 %s142, 1
      %p146 = scmp.eq.s32.totalorder %s26, 1
      %p147 = scmp.ne.s32.totalorder %s142, %s144
      %p148 = scmp.eq.s32.totalorder %s26, 0
      %p149 = por %p147, %p148
      %p150 = scmp.ne.s32.totalorder %s142, %s144
      %p151 = scmp.eq.s32.totalorder %s31, 1
      %p152 = por %p150, %p151
      %p153 = scmp.ne.s32.totalorder %s144, %s145
      %p154 = scmp.eq.s32.totalorder %s31, 0
      %p155 = por %p153, %p154
      %p156 = scmp.ne.s32.totalorder %s144, %s145
      %p157 = scmp.eq.s32.totalorder %s32, 1
      %p158 = por %p156, %p157
      %p160 = scmp.ne.s32.totalorder %s145, %s159
      %p161 = scmp.eq.s32.totalorder %s32, 0
      %p162 = por %p160, %p161
      %s163 = ssub.s32 %s34, %s41
      %p164 = scmp.eq.s32.totalorder %s163, 0
      %s166 = sadd.s32 %s165, 1
      %s167 = scalar_select %p164, %s165, %s166
      %p170 = pneg %p164
      %p171 = scmp.eq.s32.totalorder %s26, 1
      %p172 = por %p170, %p171
      %p173 = scmp.ne.s32.totalorder %s165, %s168
      %p174 = scmp.eq.s32.totalorder %s26, 0
      %p175 = por %p173, %p174
      %p176 = scmp.ne.s32.totalorder %s165, %s168
      %p177 = scmp.eq.s32.totalorder %s31, 1
      %p178 = por %p176, %p177
      %p179 = scmp.ne.s32.totalorder %s168, %s169
      %p180 = scmp.eq.s32.totalorder %s31, 0
      %p181 = por %p179, %p180
      %p182 = scmp.ne.s32.totalorder %s168, %s169
      %p183 = scmp.eq.s32.totalorder %s32, 1
      %p184 = por %p182, %p183
      %p186 = scmp.ne.s32.totalorder %s169, %s185
      %p187 = scmp.eq.s32.totalorder %s32, 0
      %p188 = por %p186, %p187
      %s190 = sadd.s32 %s189, 1
      %p193 = scmp.eq.s32.totalorder %s26, 1
      %p194 = scmp.ne.s32.totalorder %s189, %s191
      %p195 = scmp.eq.s32.totalorder %s26, 0
      %p196 = por %p194, %p195
      %p197 = scmp.ne.s32.totalorder %s189, %s191
      %p198 = scmp.eq.s32.totalorder %s31, 1
      %p199 = por %p197, %p198
      %p200 = scmp.ne.s32.totalorder %s191, %s192
      %p201 = scmp.eq.s32.totalorder %s31, 0
      %p202 = por %p200, %p201
      %p203 = scmp.ne.s32.totalorder %s191, %s192
      %p204 = scmp.eq.s32.totalorder %s32, 1
      %p205 = por %p203, %p204
      %p207 = scmp.ne.s32.totalorder %s192, %s206
      %p208 = scmp.eq.s32.totalorder %s32, 0
      %p209 = por %p207, %p208
      %s211 = sadd.s32 %s210, 1
      %p214 = scmp.eq.s32.totalorder %s26, 1
      %p215 = scmp.ne.s32.totalorder %s210, %s212
      %p216 = scmp.eq.s32.totalorder %s26, 0
      %p217 = por %p215, %p216
      %p218 = scmp.ne.s32.totalorder %s210, %s212
      %p219 = scmp.eq.s32.totalorder %s31, 1
      %p220 = por %p218, %p219
      %p221 = scmp.ne.s32.totalorder %s212, %s213
      %p222 = scmp.eq.s32.totalorder %s31, 0
      %p223 = por %p221, %p222
      %p224 = scmp.ne.s32.totalorder %s212, %s213
      %p225 = scmp.eq.s32.totalorder %s32, 1
      %p226 = por %p224, %p225
      %p228 = scmp.ne.s32.totalorder %s213, %s227
      %p229 = scmp.eq.s32.totalorder %s32, 0
      %p230 = por %p228, %p229
      %s232 = sadd.s32 %s231, 1
      %p235 = scmp.eq.s32.totalorder %s26, 1
      %p236 = scmp.ne.s32.totalorder %s231, %s233
      %p237 = scmp.eq.s32.totalorder %s26, 0
      %p238 = por %p236, %p237
      %p239 = scmp.ne.s32.totalorder %s231, %s233
      %p240 = scmp.eq.s32.totalorder %s31, 1
      %p241 = por %p239, %p240
      %p242 = scmp.ne.s32.totalorder %s233, %s234
      %p243 = scmp.eq.s32.totalorder %s31, 0
      %p244 = por %p242, %p243
      %p245 = scmp.ne.s32.totalorder %s233, %s234
      %p246 = scmp.eq.s32.totalorder %s32, 1
      %p247 = por %p245, %p246
      %p249 = scmp.ne.s32.totalorder %s234, %s248
      %p250 = scmp.eq.s32.totalorder %s32, 0
      %p251 = por %p249, %p250
      %s253 = sadd.s32 %s252, 1
      %p256 = scmp.eq.s32.totalorder %s26, 1
      %p257 = scmp.ne.s32.totalorder %s252, %s254
      %p258 = scmp.eq.s32.totalorder %s26, 0
      %p259 = por %p257, %p258
      %p260 = scmp.ne.s32.totalorder %s252, %s254
      %p261 = scmp.eq.s32.totalorder %s31, 1
      %p262 = por %p260, %p261
      %p263 = scmp.ne.s32.totalorder %s254, %s255
      %p264 = scmp.eq.s32.totalorder %s31, 0
      %p265 = por %p263, %p264
      %p266 = scmp.ne.s32.totalorder %s254, %s255
      %p267 = scmp.eq.s32.totalorder %s32, 1
      %p268 = por %p266, %p267
      %p270 = scmp.ne.s32.totalorder %s255, %s269
      %p271 = scmp.eq.s32.totalorder %s32, 0
      %p272 = por %p270, %p271
      %s273 = ssub.s32 %s33, %s45
      %p274 = scmp.eq.s32.totalorder %s273, 0
      %s276 = sadd.s32 %s275, 1
      %s277 = scalar_select %p274, %s275, %s276
      %p280 = pneg %p274
      %p281 = scmp.eq.s32.totalorder %s26, 1
      %p282 = por %p280, %p281
      %p283 = scmp.ne.s32.totalorder %s275, %s278
      %p284 = scmp.eq.s32.totalorder %s26, 0
      %p285 = por %p283, %p284
      %p286 = scmp.ne.s32.totalorder %s275, %s278
      %p287 = scmp.eq.s32.totalorder %s31, 1
      %p288 = por %p286, %p287
      %p289 = scmp.ne.s32.totalorder %s278, %s279
      %p290 = scmp.eq.s32.totalorder %s31, 0
      %p291 = por %p289, %p290
      %p292 = scmp.ne.s32.totalorder %s278, %s279
      %p293 = scmp.eq.s32.totalorder %s32, 1
      %p294 = por %p292, %p293
      %p296 = scmp.ne.s32.totalorder %s279, %s295
      %p297 = scmp.eq.s32.totalorder %s32, 0
      %p298 = por %p296, %p297
      %p299 = scmp.le.s32.totalorder 1, %s26
      %p300 = scmp.lt.s32.totalorder %s26, 3
      %p301 = pnand %p299, %p300
      %p302 = pneg %p301
      // Predicated region
      $region9: #{tpu_custom_call.1} parent=5 // pred_check
        _
      $region10: #{tpu_custom_call.1} parent=5 // pred_check_branch
        %304 = sbr.rel (%p301) target = $region12
      $region11: #{tpu_custom_call.1} parent=5 // pred_region
        %s305 = ssub.s32 %s26, 1
        // Predicated region
        $region13: #{tpu_custom_call.1} parent=11 // pred_check
          %p306 = pneg %p113
        $region14: #{tpu_custom_call.1} parent=11 // pred_check_branch
          %308 = sbr.rel (%p306) target = $region16
        $region15: #{tpu_custom_call.1} parent=11 // pred_region
          _
        $region16: #{tpu_custom_call.1} parent=11 // pred_fallthru
          _
        // Predicated region
        $region17: #{tpu_custom_call.1} parent=11 // pred_check
          %p309 = pneg %p134
        $region18: #{tpu_custom_call.1} parent=11 // pred_check_branch
          %311 = sbr.rel (%p309) target = $region20
        $region19: #{tpu_custom_call.1} parent=11 // pred_region
          _
        $region20: #{tpu_custom_call.1} parent=11 // pred_fallthru
          _
        // Predicated region
        $region21: #{tpu_custom_call.1} parent=11 // pred_check
          %p312 = pneg %p155
        $region22: #{tpu_custom_call.1} parent=11 // pred_check_branch
          %314 = sbr.rel (%p312) target = $region24
        $region23: #{tpu_custom_call.1} parent=11 // pred_region
          %s316 = ssub.s32 512, 512
          %317 = vsyncadd [#allocation7], %s316
          %s318 = sshll.u32 [#allocation8], 4
          %s319 = int_to_ptr.vmem [resolvable:$true] %s318
          %324 = dma.hbm_to_vmem [thread:$0]  %s4, 512, %s319, [#allocation7], 128, 128, 8
        $region24: #{tpu_custom_call.1} parent=11 // pred_fallthru
          _
        // Predicated region
        $region25: #{tpu_custom_call.1} parent=11 // pred_check
          %p325 = pneg %p181
        $region26: #{tpu_custom_call.1} parent=11 // pred_check_branch
          %327 = sbr.rel (%p325) target = $region28
        $region27: #{tpu_custom_call.1} parent=11 // pred_region
          %p328 = scmp.lt.s32.totalorder %s36, 0
          %s329 = scalar_select %p328, %s36, 0
          %s330 = smul.addr %s329, 8
          %s331 = scalar_lea.vmem %s5, %s330
        $region28: #{tpu_custom_call.1} parent=11 // pred_fallthru
          _
        // Predicated region
        $region29: #{tpu_custom_call.1} parent=11 // pred_check
          %p332 = pneg %p202
        $region30: #{tpu_custom_call.1} parent=11 // pred_check_branch
          %334 = sbr.rel (%p332) target = $region32
        $region31: #{tpu_custom_call.1} parent=11 // pred_region
          %s336 = ssub.s32 512, 512
          %337 = vsyncadd [#allocation10], %s336
          %s338 = sshll.u32 [#allocation9], 4
          %s339 = int_to_ptr.vmem [resolvable:$true] %s338
          %344 = dma.hbm_to_vmem [thread:$0]  %s6, 512, %s339, [#allocation10], 128, 128, 8
        $region32: #{tpu_custom_call.1} parent=11 // pred_fallthru
          _
        // Predicated region
        $region33: #{tpu_custom_call.1} parent=11 // pred_check
          %p345 = pneg %p223
        $region34: #{tpu_custom_call.1} parent=11 // pred_check_branch
          %347 = sbr.rel (%p345) target = $region36
        $region35: #{tpu_custom_call.1} parent=11 // pred_region
          %s349 = ssub.s32 16, 16
          %350 = vsyncadd [#allocation10], %s349
          %s352 = sshll.u32 [#allocation11], 4
          %s353 = int_to_ptr.vmem [resolvable:$true] %s352
          %355 = dma.hbm_to_vmem [thread:$0]  %s7, 16, %s353, [#allocation10]
        $region36: #{tpu_custom_call.1} parent=11 // pred_fallthru
          _
        // Predicated region
        $region37: #{tpu_custom_call.1} parent=11 // pred_check
          %p356 = pneg %p244
        $region38: #{tpu_custom_call.1} parent=11 // pred_check_branch
          %358 = sbr.rel (%p356) target = $region40
        $region39: #{tpu_custom_call.1} parent=11 // pred_region
          _
        $region40: #{tpu_custom_call.1} parent=11 // pred_fallthru
          _
        // Predicated region
        $region41: #{tpu_custom_call.1} parent=11 // pred_check
          %p359 = pneg %p265
        $region42: #{tpu_custom_call.1} parent=11 // pred_check_branch
          %361 = sbr.rel (%p359) target = $region44
        $region43: #{tpu_custom_call.1} parent=11 // pred_region
          _
        $region44: #{tpu_custom_call.1} parent=11 // pred_fallthru
          _
      $region12: #{tpu_custom_call.1} parent=5 // pred_fallthru
        _
      %p362 = scmp.lt.s32.totalorder %s26, 2
      // Predicated region
      $region45: #{tpu_custom_call.1} parent=5 // pred_check
        %p363 = pneg %p362
      $region46: #{tpu_custom_call.1} parent=5 // pred_check_branch
        %365 = sbr.rel (%p363) target = $region48
      $region47: #{tpu_custom_call.1} parent=5 // pred_region
        // Predicated region
        $region49: #{tpu_custom_call.1} parent=47 // pred_check
          %p366 = pneg %p58
        $region50: #{tpu_custom_call.1} parent=47 // pred_check_branch
          %368 = sbr.rel (%p366) target = $region52
        $region51: #{tpu_custom_call.1} parent=47 // pred_region
          %s369 = sand.u32 %s48, 1
          %s370 = scalar_lea.sflag [#allocation4], %s369
          %s371 = sand.u32 %s48, 1
          %s372 = scalar_lea.vmem [#allocation3], %s371
          %s374 = ssub.s32 16, 16
          %375 = vsyncadd %s370, %s374
          %s376 = smul.addr %s33, 16
          %s377 = scalar_lea.hbm %s0, %s376
          %s379 = sshll.u32 %s372, 4
          %s380 = int_to_ptr.vmem [resolvable:$true] %s379
          %382 = dma.hbm_to_vmem [thread:$0]  %s377, 16, %s380, %s370
        $region52: #{tpu_custom_call.1} parent=47 // pred_fallthru
          _
        // Predicated region
        $region53: #{tpu_custom_call.1} parent=47 // pred_check
          %p383 = pneg %p86
        $region54: #{tpu_custom_call.1} parent=47 // pred_check_branch
          %385 = sbr.rel (%p383) target = $region56
        $region55: #{tpu_custom_call.1} parent=47 // pred_region
          %s386 = sand.u32 %s26, 1
          %s387 = scalar_lea.sflag [#allocation7], %s386
          %s388 = sand.u32 %s76, 1
          %s389 = smul.addr %s388, 8
          %s390 = scalar_lea.vmem [#allocation6], %s389
          %s392 = ssub.s32 128, 128
          %393 = vsyncadd %s387, %s392
          %s394 = sadd.s32 %s34, %s33
          %s395 = smul.addr %s394, 128
          %s396 = scalar_lea.hbm %s1, %s395
          %s398 = sshll.u32 %s390, 4
          %s399 = int_to_ptr.vmem [resolvable:$true] %s398
          %401 = dma.hbm_to_vmem [thread:$0]  %s396, 128, %s399, %s387
        $region56: #{tpu_custom_call.1} parent=47 // pred_fallthru
          _
      $region48: #{tpu_custom_call.1} parent=5 // pred_fallthru
        _
      %p402 = scmp.le.s32.totalorder 1, %s26
      %p403 = scmp.lt.s32.totalorder %s26, 3
      %p404 = pnand %p402, %p403
      %p405 = pneg %p404
      // Predicated region
      $region57: #{tpu_custom_call.1} parent=5 // pred_check
        _
      $region58: #{tpu_custom_call.1} parent=5 // pred_check_branch
        %407 = sbr.rel (%p404) target = $region60
      $region59: #{tpu_custom_call.1} parent=5 // pred_region
        %s408 = ssub.s32 %s26, 1
        %s409 = sand.u32 %s51, 1
        %s410 = scalar_lea.sflag [#allocation4], %s409
        %s411 = sand.u32 %s51, 1
        %s412 = scalar_lea.vmem [#allocation3], %s411
        // Predicated region
        $region61: #{tpu_custom_call.1} parent=59 // pred_check
          %p413 = pneg %p64
        $region62: #{tpu_custom_call.1} parent=59 // pred_check_branch
          %415 = sbr.rel (%p413) target = $region64
        $region63: #{tpu_custom_call.1} parent=59 // pred_region
          %416 = dma.done %s410, 16
        $region64: #{tpu_custom_call.1} parent=59 // pred_fallthru
          _
        %s417 = sand.u32 %s31, 1
        %s418 = scalar_lea.sflag [#allocation7], %s417
        %s419 = sand.u32 %s79, 1
        %s420 = smul.addr %s419, 8
        %s421 = scalar_lea.vmem [#allocation6], %s420
        // Predicated region
        $region65: #{tpu_custom_call.1} parent=59 // pred_check
          %p422 = pneg %p92
        $region66: #{tpu_custom_call.1} parent=59 // pred_check_branch
          %424 = sbr.rel (%p422) target = $region68
        $region67: #{tpu_custom_call.1} parent=59 // pred_region
          %425 = dma.done %s418, 128
        $region68: #{tpu_custom_call.1} parent=59 // pred_fallthru
          _
        // Predicated region
        $region69: #{tpu_custom_call.1} parent=59 // pred_check
          %p426 = pneg %p155
        $region70: #{tpu_custom_call.1} parent=59 // pred_check_branch
          %428 = sbr.rel (%p426) target = $region72
        $region71: #{tpu_custom_call.1} parent=59 // pred_region
          %429 = dma.done [#allocation7], 512
        $region72: #{tpu_custom_call.1} parent=59 // pred_fallthru
          _
        // Predicated region
        $region73: #{tpu_custom_call.1} parent=59 // pred_check
          %p430 = pneg %p202
        $region74: #{tpu_custom_call.1} parent=59 // pred_check_branch
          %432 = sbr.rel (%p430) target = $region76
        $region75: #{tpu_custom_call.1} parent=59 // pred_region
          %433 = dma.done [#allocation10], 512
        $region76: #{tpu_custom_call.1} parent=59 // pred_fallthru
          _
        // Predicated region
        $region77: #{tpu_custom_call.1} parent=59 // pred_check
          %p434 = pneg %p223
        $region78: #{tpu_custom_call.1} parent=59 // pred_check_branch
          %436 = sbr.rel (%p434) target = $region80
        $region79: #{tpu_custom_call.1} parent=59 // pred_region
          %437 = dma.done [#allocation10], 16
        $region80: #{tpu_custom_call.1} parent=59 // pred_fallthru
          _
        %s438 = sand.u32 %s51, 1
        %s439 = scalar_lea.sflag [#allocation4], %s438
        %s440 = sand.u32 %s51, 1
        %s441 = scalar_lea.vmem [#allocation3], %s440
        %p442 = pneg %p64
        %p443 = pneg %p61
        %s444 = sand.u32 %s31, 1
        %s445 = scalar_lea.sflag [#allocation7], %s444
        %s446 = sand.u32 %s79, 1
        %s447 = smul.addr %s446, 8
        %s448 = scalar_lea.vmem [#allocation6], %s447
        %p449 = pneg %p92
        %p450 = pneg %p89
        %p451 = pneg %p113
        %p452 = pneg %p110
        %p453 = pneg %p134
        %p454 = pneg %p131
        %p455 = pneg %p155
        %p456 = pneg %p152
        %p457 = scmp.lt.s32.totalorder %s36, 0
        %s458 = scalar_select %p457, %s36, 0
        %s459 = smul.addr %s458, 8
        %s460 = scalar_lea.vmem %s5, %s459
        %p461 = pneg %p181
        %p462 = pneg %p178
        %p463 = pneg %p202
        %p464 = pneg %p199
        %p465 = pneg %p223
        %p466 = pneg %p220
        %p467 = pneg %p244
        %p468 = pneg %p241
        %p469 = pneg %p265
        %p470 = pneg %p262
        %p471 = pneg %p291
        %p472 = pneg %p288
        %s473 = sand.u32 %s278, 1
        %s474 = scalar_lea.sflag [#allocation5], %s473
        %s475 = sand.u32 %s278, 1
        %s476 = scalar_lea.vmem [#allocation12], %s475
        %p477 = scmp.lt.s32.totalorder %s36, 0
        %s478 = scalar_select %p477, %s36, 0
        %s479 = smul.addr %s478, 8
        %s480 = scalar_lea.vmem %s5, %s479
        %p481 = scmp.eq.s32.totalorder %s36, 0
        // Predicated region
        $region81: #{tpu_custom_call.1} parent=59 // pred_check
          %p482 = pneg %p481
        $region82: #{tpu_custom_call.1} parent=59 // pred_check_branch
          %484 = sbr.rel (%p482) target = $region84
        $region83: #{tpu_custom_call.1} parent=59 // pred_region
          %vm485 = vcmask 261120
          %486 = vst.msk [vmem:[#allocation2] sm:$0xff] %vm485, 0.0
          %487 = vst.msk [vmem:[#allocation2 + $0x8] sm:$0xff] %vm485, 0.0
        $region84: #{tpu_custom_call.1} parent=59 // pred_fallthru
          _
        %v488 = vld [vmem:[%s480] sm:$0xff]
        %v489 = vld [vmem:[%s480 + $0x8] sm:$0xff]
        %v490 = vld [vmem:[#allocation2] sm:$0xff]
        %v491 = vld [vmem:[#allocation2 + $0x8] sm:$0xff]
        %v492 = vld [vmem:[%s421] sm:$0xff]
        %vm493 = vcmask 64512
        %v495 = vsel %vm493, %v488, 0
        %v498 = vsel %vm493, %v489, 0
        %500 = vmatprep.subr.mxu0 0.0
        %501 = vmatpush1.msra.mxu0 0.0
        %502 = vmatprep.subr.mxu0 0.0
        %503 = vmatpush1.msra.mxu0 0.0
        %504 = vmatprep.subr.mxu0 0.0
        %505 = vmatpush1.msra.mxu0 0.0
        %506 = vmatprep.subr.mxu0 0.0
        %507 = vmatpush1.msra.mxu0 0.0
        %508 = vmatprep.subr.mxu0 0.0
        %509 = vmatpush1.msra.mxu0 0.0
        %510 = vmatprep.subr.mxu0 0.0
        %511 = vmatpush1.msra.mxu0 0.0
        %512 = vmatprep.subr.mxu0 0.0
        %513 = vmatpush1.msra.mxu0 0.0
        %514 = vmatprep.subr.mxu0 0.0
        %515 = vmatpush1.msra.mxu0 0.0
        %516 = vmatprep.subr.mxu0 0.0
        %517 = vmatpush1.msra.mxu0 0.0
        %518 = vmatprep.subr.mxu0 0.0
        %519 = vmatpush1.msra.mxu0 0.0
        %520 = vmatprep.subr.mxu0 0.0
        %521 = vmatpush1.msra.mxu0 0.0
        %522 = vmatprep.subr.mxu0 0.0
        %523 = vmatpush1.msra.mxu0 0.0
        %524 = vmatprep.subr.mxu0 0.0
        %525 = vmatpush1.msra.mxu0 0.0
        %526 = vmatprep.subr.mxu0 0.0
        %527 = vmatpush1.msra.mxu0 0.0
        %528 = vmatprep.subr.mxu0 0.0
        %529 = vmatpush1.msra.mxu0 0.0
        %530 = vmatprep.subr.mxu0 0.0
        %531 = vmatpush1.msra.mxu0 %v492
        %532 = vmatprep.subr.mxu0 0.0
        %533 = vmatpush2.msra.mxu0 0.0
        %534 = vmatprep.subr.mxu0 0.0
        %535 = vmatpush2.msra.mxu0 0.0
        %536 = vmatprep.subr.mxu0 0.0
        %537 = vmatpush2.msra.mxu0 0.0
        %538 = vmatprep.subr.mxu0 0.0
        %539 = vmatpush2.msra.mxu0 0.0
        %540 = vmatprep.subr.mxu0 0.0
        %541 = vmatpush2.msra.mxu0 0.0
        %542 = vmatprep.subr.mxu0 0.0
        %543 = vmatpush2.msra.mxu0 0.0
        %544 = vmatprep.subr.mxu0 0.0
        %545 = vmatpush2.msra.mxu0 0.0
        %546 = vmatprep.subr.mxu0 0.0
        %547 = vmatpush2.msra.mxu0 0.0
        %548 = vmatprep.subr.mxu0 0.0
        %549 = vmatpush2.msra.mxu0 0.0
        %550 = vmatprep.subr.mxu0 0.0
        %551 = vmatpush2.msra.mxu0 0.0
        %552 = vmatprep.subr.mxu0 0.0
        %553 = vmatpush2.msra.mxu0 0.0
        %554 = vmatprep.subr.mxu0 0.0
        %555 = vmatpush2.msra.mxu0 0.0
        %556 = vmatprep.subr.mxu0 0.0
        %557 = vmatpush2.msra.mxu0 0.0
        %558 = vmatprep.subr.mxu0 0.0
        %559 = vmatpush2.msra.mxu0 0.0
        %560 = vmatprep.subr.mxu0 0.0
        %561 = vmatpush2.msra.mxu0 0.0
        %562 = vmatprep.subr.mxu0 0.0
        %563 = vmatpush2.msra.mxu0 0.0
        %564 = vmatprep.mubr.f32.mxu0 0.0
        %565 = vmatmul.mubr.f32.gmra.mxu0 %v495
        %v566 = vpop.f32.mrf.mxu0
        %v567 = vadd.f32 0.0, %v566
        %v568 = vpop.f32.mrf.mxu0
        %569 = vmatprep.mubr.f32.mxu0 0.0
        %570 = vmatmul.mubr.f32.gmra.mxu0 %v498
        %v571 = vpop.f32.mrf.mxu0
        %v572 = vadd.f32 0.0, %v571
        %v573 = vpop.f32.mrf.mxu0
        %574 = vdwg.mxu0
        %v575 = vadd.f32 %v490, %v567
        %v576 = vadd.f32 %v491, %v572
        %vm577 = vcmask 261120
        %578 = vst.msk [vmem:[#allocation2] sm:$0xff] %vm577, %v575
        %579 = vst.msk [vmem:[#allocation2 + $0x8] sm:$0xff] %vm577, %v576
        // Predicated region
        $region85: #{tpu_custom_call.1} parent=59 // pred_check
          %p580 = pneg %p481
        $region86: #{tpu_custom_call.1} parent=59 // pred_check_branch
          %582 = sbr.rel (%p580) target = $region88
        $region87: #{tpu_custom_call.1} parent=59 // pred_region
          %v583 = vld [vmem:[%s8] sm:$0xff]
          %v584 = vld [vmem:[%s8 + $0x8] sm:$0xff]
          %v585 = vld [vmem:[%s8 + $0x10] sm:$0xff]
          %v586 = vld [vmem:[%s8 + $0x18] sm:$0xff]
          %v587 = vld [vmem:[%s9] sm:$0xf]
          %v588 = vld [vmem:[%s412] sm:$0x1]
          %v589 = vld [vmem:[%s2] sm:$0xff]
          %v590 = vld [vmem:[%s2 + $0x8] sm:$0xff]
          %v591 = vld [vmem:[%s2 + $0x10] sm:$0xff]
          %v592 = vld [vmem:[%s2 + $0x18] sm:$0xff]
          %v594 = vsel %vm577, %v588, 0
          %596 = vmatprep.subr.mxu0 0.0
          %597 = vmatpush1.msra.mxu0 0.0
          %598 = vmatprep.subr.mxu0 0.0
          %599 = vmatpush1.msra.mxu0 0.0
          %600 = vmatprep.subr.mxu0 0.0
          %601 = vmatpush1.msra.mxu0 0.0
          %602 = vmatprep.subr.mxu0 0.0
          %603 = vmatpush1.msra.mxu0 0.0
          %604 = vmatprep.subr.mxu0 0.0
          %605 = vmatpush1.msra.mxu0 0.0
          %606 = vmatprep.subr.mxu0 0.0
          %607 = vmatpush1.msra.mxu0 0.0
          %608 = vmatprep.subr.mxu0 0.0
          %609 = vmatpush1.msra.mxu0 0.0
          %610 = vmatprep.subr.mxu0 0.0
          %611 = vmatpush1.msra.mxu0 0.0
          %612 = vmatprep.subr.mxu0 0.0
          %613 = vmatpush1.msra.mxu0 0.0
          %614 = vmatprep.subr.mxu0 0.0
          %615 = vmatpush1.msra.mxu0 0.0
          %616 = vmatprep.subr.mxu0 0.0
          %617 = vmatpush1.msra.mxu0 0.0
          %618 = vmatprep.subr.mxu0 0.0
          %619 = vmatpush1.msra.mxu0 0.0
          %620 = vmatprep.subr.mxu0 0.0
          %621 = vmatpush1.msra.mxu0 %v592
          %622 = vmatprep.subr.mxu0 0.0
          %623 = vmatpush1.msra.mxu0 %v591
          %624 = vmatprep.subr.mxu0 0.0
          %625 = vmatpush1.msra.mxu0 %v590
          %626 = vmatprep.subr.mxu0 0.0
          %627 = vmatpush1.msra.mxu0 %v589
          %628 = vmatprep.subr.mxu0 0.0
          %629 = vmatpush2.msra.mxu0 0.0
          %630 = vmatprep.subr.mxu0 0.0
          %631 = vmatpush2.msra.mxu0 0.0
          %632 = vmatprep.subr.mxu0 0.0
          %633 = vmatpush2.msra.mxu0 0.0
          %634 = vmatprep.subr.mxu0 0.0
          %635 = vmatpush2.msra.mxu0 0.0
          %636 = vmatprep.subr.mxu0 0.0
          %637 = vmatpush2.msra.mxu0 0.0
          %638 = vmatprep.subr.mxu0 0.0
          %639 = vmatpush2.msra.mxu0 0.0
          %640 = vmatprep.subr.mxu0 0.0
          %641 = vmatpush2.msra.mxu0 0.0
          %642 = vmatprep.subr.mxu0 0.0
          %643 = vmatpush2.msra.mxu0 0.0
          %644 = vmatprep.subr.mxu0 0.0
          %645 = vmatpush2.msra.mxu0 0.0
          %646 = vmatprep.subr.mxu0 0.0
          %647 = vmatpush2.msra.mxu0 0.0
          %648 = vmatprep.subr.mxu0 0.0
          %649 = vmatpush2.msra.mxu0 0.0
          %650 = vmatprep.subr.mxu0 0.0
          %651 = vmatpush2.msra.mxu0 0.0
          %652 = vmatprep.subr.mxu0 0.0
          %653 = vmatpush2.msra.mxu0 0.0
          %654 = vmatprep.subr.mxu0 0.0
          %655 = vmatpush2.msra.mxu0 0.0
          %656 = vmatprep.subr.mxu0 0.0
          %657 = vmatpush2.msra.mxu0 0.0
          %658 = vmatprep.subr.mxu0 0.0
          %659 = vmatpush2.msra.mxu0 0.0
          %660 = vmatprep.mubr.f32.mxu0 0.0
          %661 = vmatmul.mubr.f32.gmra.mxu0 %v594
          %v662 = vpop.f32.mrf.mxu0
          %v663 = vadd.f32 0.0, %v662
          %v664 = vpop.f32.mrf.mxu0
          %665 = vdwg.mxu0
          %v666 = vmul.f32 %v663, 0.35355338
          %v667 = vld [vmem:[#allocation2] sm:$0xff]
          %v668 = vld [vmem:[#allocation2 + $0x8] sm:$0xff]
          %v669 = vld [vmem:[%s3] sm:$0xff]
          %v670 = vld [vmem:[%s3 + $0x8] sm:$0xff]
          %v671 = vld [vmem:[%s3 + $0x10] sm:$0xff]
          %v672 = vld [vmem:[%s3 + $0x18] sm:$0xff]
          %v674 = vsel %vm577, %v667, 0
          %676 = vmatprep.subr.mxu0 0.0
          %677 = vmatpush1.msra.mxu0 0.0
          %678 = vmatprep.subr.mxu0 0.0
          %679 = vmatpush1.msra.mxu0 0.0
          %680 = vmatprep.subr.mxu0 0.0
          %681 = vmatpush1.msra.mxu0 0.0
          %682 = vmatprep.subr.mxu0 0.0
          %683 = vmatpush1.msra.mxu0 0.0
          %684 = vmatprep.subr.mxu0 0.0
          %685 = vmatpush1.msra.mxu0 0.0
          %686 = vmatprep.subr.mxu0 0.0
          %687 = vmatpush1.msra.mxu0 0.0
          %688 = vmatprep.subr.mxu0 0.0
          %689 = vmatpush1.msra.mxu0 0.0
          %690 = vmatprep.subr.mxu0 0.0
          %691 = vmatpush1.msra.mxu0 0.0
          %692 = vmatprep.subr.mxu0 0.0
          %693 = vmatpush1.msra.mxu0 0.0
          %694 = vmatprep.subr.mxu0 0.0
          %695 = vmatpush1.msra.mxu0 0.0
          %696 = vmatprep.subr.mxu0 0.0
          %697 = vmatpush1.msra.mxu0 0.0
          %698 = vmatprep.subr.mxu0 0.0
          %699 = vmatpush1.msra.mxu0 0.0
          %700 = vmatprep.subr.mxu0 0.0
          %701 = vmatpush1.msra.mxu0 %v672
          %702 = vmatprep.subr.mxu0 0.0
          %703 = vmatpush1.msra.mxu0 %v671
          %704 = vmatprep.subr.mxu0 0.0
          %705 = vmatpush1.msra.mxu0 %v670
          %706 = vmatprep.subr.mxu0 0.0
          %707 = vmatpush1.msra.mxu0 %v669
          %708 = vmatprep.subr.mxu0 0.0
          %709 = vmatpush2.msra.mxu0 0.0
          %710 = vmatprep.subr.mxu0 0.0
          %711 = vmatpush2.msra.mxu0 0.0
          %712 = vmatprep.subr.mxu0 0.0
          %713 = vmatpush2.msra.mxu0 0.0
          %714 = vmatprep.subr.mxu0 0.0
          %715 = vmatpush2.msra.mxu0 0.0
          %716 = vmatprep.subr.mxu0 0.0
          %717 = vmatpush2.msra.mxu0 0.0
          %718 = vmatprep.subr.mxu0 0.0
          %719 = vmatpush2.msra.mxu0 0.0
          %720 = vmatprep.subr.mxu0 0.0
          %721 = vmatpush2.msra.mxu0 0.0
          %722 = vmatprep.subr.mxu0 0.0
          %723 = vmatpush2.msra.mxu0 0.0
          %724 = vmatprep.subr.mxu0 0.0
          %725 = vmatpush2.msra.mxu0 0.0
          %726 = vmatprep.subr.mxu0 0.0
          %727 = vmatpush2.msra.mxu0 0.0
          %728 = vmatprep.subr.mxu0 0.0
          %729 = vmatpush2.msra.mxu0 0.0
          %730 = vmatprep.subr.mxu0 0.0
          %731 = vmatpush2.msra.mxu0 0.0
          %732 = vmatprep.subr.mxu0 0.0
          %733 = vmatpush2.msra.mxu0 0.0
          %734 = vmatprep.subr.mxu0 0.0
          %735 = vmatpush2.msra.mxu0 0.0
          %736 = vmatprep.subr.mxu0 0.0
          %737 = vmatpush2.msra.mxu0 0.0
          %738 = vmatprep.subr.mxu0 0.0
          %739 = vmatpush2.msra.mxu0 0.0
          %740 = vmatprep.mubr.f32.mxu0 0.0
          %741 = vmatmul.mubr.f32.gmra.mxu0 %v674
          %v742 = vpop.f32.mrf.mxu0
          %v743 = vadd.f32 0.0, %v742
          %v744 = vpop.f32.mrf.mxu0
          %745 = vdwg.mxu0
          %v746 = vld [vmem:[#allocation8] sm:$0xff]
          %v747 = vld [vmem:[#allocation8 + $0x8] sm:$0xff]
          %v748 = vld [vmem:[#allocation8 + $0x10] sm:$0xff]
          %v749 = vld [vmem:[#allocation8 + $0x18] sm:$0xff]
          %v751 = vsel %vm577, %v668, 0
          %753 = vmatprep.subr.mxu0 0.0
          %754 = vmatpush1.msra.mxu0 0.0
          %755 = vmatprep.subr.mxu0 0.0
          %756 = vmatpush1.msra.mxu0 0.0
          %757 = vmatprep.subr.mxu0 0.0
          %758 = vmatpush1.msra.mxu0 0.0
          %759 = vmatprep.subr.mxu0 0.0
          %760 = vmatpush1.msra.mxu0 0.0
          %761 = vmatprep.subr.mxu0 0.0
          %762 = vmatpush1.msra.mxu0 0.0
          %763 = vmatprep.subr.mxu0 0.0
          %764 = vmatpush1.msra.mxu0 0.0
          %765 = vmatprep.subr.mxu0 0.0
          %766 = vmatpush1.msra.mxu0 0.0
          %767 = vmatprep.subr.mxu0 0.0
          %768 = vmatpush1.msra.mxu0 0.0
          %769 = vmatprep.subr.mxu0 0.0
          %770 = vmatpush1.msra.mxu0 0.0
          %771 = vmatprep.subr.mxu0 0.0
          %772 = vmatpush1.msra.mxu0 0.0
          %773 = vmatprep.subr.mxu0 0.0
          %774 = vmatpush1.msra.mxu0 0.0
          %775 = vmatprep.subr.mxu0 0.0
          %776 = vmatpush1.msra.mxu0 0.0
          %777 = vmatprep.subr.mxu0 0.0
          %778 = vmatpush1.msra.mxu0 %v749
          %779 = vmatprep.subr.mxu0 0.0
          %780 = vmatpush1.msra.mxu0 %v748
          %781 = vmatprep.subr.mxu0 0.0
          %782 = vmatpush1.msra.mxu0 %v747
          %783 = vmatprep.subr.mxu0 0.0
          %784 = vmatpush1.msra.mxu0 %v746
          %785 = vmatprep.subr.mxu0 0.0
          %786 = vmatpush2.msra.mxu0 0.0
          %787 = vmatprep.subr.mxu0 0.0
          %788 = vmatpush2.msra.mxu0 0.0
          %789 = vmatprep.subr.mxu0 0.0
          %790 = vmatpush2.msra.mxu0 0.0
          %791 = vmatprep.subr.mxu0 0.0
          %792 = vmatpush2.msra.mxu0 0.0
          %793 = vmatprep.subr.mxu0 0.0
          %794 = vmatpush2.msra.mxu0 0.0
          %795 = vmatprep.subr.mxu0 0.0
          %796 = vmatpush2.msra.mxu0 0.0
          %797 = vmatprep.subr.mxu0 0.0
          %798 = vmatpush2.msra.mxu0 0.0
          %799 = vmatprep.subr.mxu0 0.0
          %800 = vmatpush2.msra.mxu0 0.0
          %801 = vmatprep.subr.mxu0 0.0
          %802 = vmatpush2.msra.mxu0 0.0
          %803 = vmatprep.subr.mxu0 0.0
          %804 = vmatpush2.msra.mxu0 0.0
          %805 = vmatprep.subr.mxu0 0.0
          %806 = vmatpush2.msra.mxu0 0.0
          %807 = vmatprep.subr.mxu0 0.0
          %808 = vmatpush2.msra.mxu0 0.0
          %809 = vmatprep.subr.mxu0 0.0
          %810 = vmatpush2.msra.mxu0 0.0
          %811 = vmatprep.subr.mxu0 0.0
          %812 = vmatpush2.msra.mxu0 0.0
          %813 = vmatprep.subr.mxu0 0.0
          %814 = vmatpush2.msra.mxu0 0.0
          %815 = vmatprep.subr.mxu0 0.0
          %816 = vmatpush2.msra.mxu0 0.0
          %817 = vmatprep.mubr.f32.mxu0 0.0
          %818 = vmatmul.mubr.f32.gmra.mxu0 %v751
          %v819 = vpop.f32.mrf.mxu0
          %v820 = vadd.f32 0.0, %v819
          %v821 = vpop.f32.mrf.mxu0
          %822 = vdwg.mxu0
          %v823 = vlaneseq
          %v824 = vshrl.u32 %v823, 7
          %v825 = vsub.s32 0, %v824
          %v826 = vrot.slane %v666, %v825
          %v827 = vmul.f32 %v743, %v826
          %v829 = vsel %vm577, %v827, 0
          %831 = vmatprep.subr.mxu0 0.0
          %832 = vmatpush1.msra.mxu0 0.0
          %833 = vmatprep.subr.mxu0 0.0
          %834 = vmatpush1.msra.mxu0 0.0
          %835 = vmatprep.subr.mxu0 0.0
          %836 = vmatpush1.msra.mxu0 0.0
          %837 = vmatprep.subr.mxu0 0.0
          %838 = vmatpush1.msra.mxu0 0.0
          %839 = vmatprep.subr.mxu0 0.0
          %840 = vmatpush1.msra.mxu0 0.0
          %841 = vmatprep.subr.mxu0 0.0
          %842 = vmatpush1.msra.mxu0 0.0
          %843 = vmatprep.subr.mxu0 0.0
          %844 = vmatpush1.msra.mxu0 0.0
          %845 = vmatprep.subr.mxu0 0.0
          %846 = vmatpush1.msra.mxu0 0.0
          %847 = vmatprep.subr.mxu0 0.0
          %848 = vmatpush1.msra.mxu0 0.0
          %849 = vmatprep.subr.mxu0 0.0
          %850 = vmatpush1.msra.mxu0 0.0
          %851 = vmatprep.subr.mxu0 0.0
          %852 = vmatpush1.msra.mxu0 0.0
          %853 = vmatprep.subr.mxu0 0.0
          %854 = vmatpush1.msra.mxu0 0.0
          %855 = vmatprep.subr.mxu0 0.0
          %856 = vmatpush1.msra.mxu0 %v586
          %857 = vmatprep.subr.mxu0 0.0
          %858 = vmatpush1.msra.mxu0 %v585
          %859 = vmatprep.subr.mxu0 0.0
          %860 = vmatpush1.msra.mxu0 %v584
          %861 = vmatprep.subr.mxu0 0.0
          %862 = vmatpush1.msra.mxu0 %v583
          %863 = vmatprep.subr.mxu0 0.0
          %864 = vmatpush2.msra.mxu0 0.0
          %865 = vmatprep.subr.mxu0 0.0
          %866 = vmatpush2.msra.mxu0 0.0
          %867 = vmatprep.subr.mxu0 0.0
          %868 = vmatpush2.msra.mxu0 0.0
          %869 = vmatprep.subr.mxu0 0.0
          %870 = vmatpush2.msra.mxu0 0.0
          %871 = vmatprep.subr.mxu0 0.0
          %872 = vmatpush2.msra.mxu0 0.0
          %873 = vmatprep.subr.mxu0 0.0
          %874 = vmatpush2.msra.mxu0 0.0
          %875 = vmatprep.subr.mxu0 0.0
          %876 = vmatpush2.msra.mxu0 0.0
          %877 = vmatprep.subr.mxu0 0.0
          %878 = vmatpush2.msra.mxu0 0.0
          %879 = vmatprep.subr.mxu0 0.0
          %880 = vmatpush2.msra.mxu0 0.0
          %881 = vmatprep.subr.mxu0 0.0
          %882 = vmatpush2.msra.mxu0 0.0
          %883 = vmatprep.subr.mxu0 0.0
          %884 = vmatpush2.msra.mxu0 0.0
          %885 = vmatprep.subr.mxu0 0.0
          %886 = vmatpush2.msra.mxu0 0.0
          %887 = vmatprep.subr.mxu0 0.0
          %888 = vmatpush2.msra.mxu0 0.0
          %889 = vmatprep.subr.mxu0 0.0
          %890 = vmatpush2.msra.mxu0 0.0
          %891 = vmatprep.subr.mxu0 0.0
          %892 = vmatpush2.msra.mxu0 0.0
          %893 = vmatprep.subr.mxu0 0.0
          %894 = vmatpush2.msra.mxu0 0.0
          %895 = vmatprep.mubr.f32.mxu0 0.0
          %896 = vmatmul.mubr.f32.gmra.mxu0 %v829
          %v897 = vpop.f32.mrf.mxu0
          %v898 = vadd.f32 0.0, %v897
          %v899 = vpop.f32.mrf.mxu0
          %900 = vdwg.mxu0
          %vm901 = vcmask 31744
          %v902 = vsel %vm901, %v898, -inf
          %v903 = vrot.slane %v902, 4
          %v904 = vmax.f32 %v902, %v903
          %v905 = vrot.slane %v904, 2
          %v906 = vmax.f32 %v904, %v905
          %v907 = vrot.slane %v906, 1
          %v908 = vmax.f32 %v906, %v907
          %v909 = vsub.f32 %v898, %v908
          %v910 = vmul.f32 %v909, 1.442695
          %v911 = vpow.pop %v910
          %v912 = vsel %vm901, %v911, 0.0
          %v913 = vrot.slane %v912, 4
          %v914 = vadd.f32 %v912, %v913
          %v915 = vrot.slane %v914, 2
          %v916 = vadd.f32 %v914, %v915
          %v917 = vrot.slane %v916, 1
          %v918 = vadd.f32 %v916, %v917
          %v919 = vrcp.pop %v918
          %v920 = vmul.f32 %v911, %v919
          %v922 = vsel %vm901, %v920, 0
          %vm924 = vcmask 1043456
          %v926 = vsel %vm924, %v587, 0
          %928 = vmatprep.subr.mxu0 0.0
          %929 = vmatpush1.msra.mxu0 0.0
          %930 = vmatprep.subr.mxu0 0.0
          %931 = vmatpush1.msra.mxu0 0.0
          %932 = vmatprep.subr.mxu0 0.0
          %933 = vmatpush1.msra.mxu0 0.0
          %934 = vmatprep.subr.mxu0 0.0
          %935 = vmatpush1.msra.mxu0 0.0
          %936 = vmatprep.subr.mxu0 0.0
          %937 = vmatpush1.msra.mxu0 0.0
          %938 = vmatprep.subr.mxu0 0.0
          %939 = vmatpush1.msra.mxu0 0.0
          %940 = vmatprep.subr.mxu0 0.0
          %941 = vmatpush1.msra.mxu0 0.0
          %942 = vmatprep.subr.mxu0 0.0
          %943 = vmatpush1.msra.mxu0 0.0
          %944 = vmatprep.subr.mxu0 0.0
          %945 = vmatpush1.msra.mxu0 0.0
          %946 = vmatprep.subr.mxu0 0.0
          %947 = vmatpush1.msra.mxu0 0.0
          %948 = vmatprep.subr.mxu0 0.0
          %949 = vmatpush1.msra.mxu0 0.0
          %950 = vmatprep.subr.mxu0 0.0
          %951 = vmatpush1.msra.mxu0 0.0
          %952 = vmatprep.subr.mxu0 0.0
          %953 = vmatpush1.msra.mxu0 0.0
          %954 = vmatprep.subr.mxu0 0.0
          %955 = vmatpush1.msra.mxu0 0.0
          %956 = vmatprep.subr.mxu0 0.0
          %957 = vmatpush1.msra.mxu0 0.0
          %958 = vmatprep.subr.mxu0 0.0
          %959 = vmatpush1.msra.mxu0 %v926
          %960 = vmatprep.subr.mxu0 0.0
          %961 = vmatpush2.msra.mxu0 0.0
          %962 = vmatprep.subr.mxu0 0.0
          %963 = vmatpush2.msra.mxu0 0.0
          %964 = vmatprep.subr.mxu0 0.0
          %965 = vmatpush2.msra.mxu0 0.0
          %966 = vmatprep.subr.mxu0 0.0
          %967 = vmatpush2.msra.mxu0 0.0
          %968 = vmatprep.subr.mxu0 0.0
          %969 = vmatpush2.msra.mxu0 0.0
          %970 = vmatprep.subr.mxu0 0.0
          %971 = vmatpush2.msra.mxu0 0.0
          %972 = vmatprep.subr.mxu0 0.0
          %973 = vmatpush2.msra.mxu0 0.0
          %974 = vmatprep.subr.mxu0 0.0
          %975 = vmatpush2.msra.mxu0 0.0
          %976 = vmatprep.subr.mxu0 0.0
          %977 = vmatpush2.msra.mxu0 0.0
          %978 = vmatprep.subr.mxu0 0.0
          %979 = vmatpush2.msra.mxu0 0.0
          %980 = vmatprep.subr.mxu0 0.0
          %981 = vmatpush2.msra.mxu0 0.0
          %982 = vmatprep.subr.mxu0 0.0
          %983 = vmatpush2.msra.mxu0 0.0
          %984 = vmatprep.subr.mxu0 0.0
          %985 = vmatpush2.msra.mxu0 0.0
          %986 = vmatprep.subr.mxu0 0.0
          %987 = vmatpush2.msra.mxu0 0.0
          %988 = vmatprep.subr.mxu0 0.0
          %989 = vmatpush2.msra.mxu0 0.0
          %990 = vmatprep.subr.mxu0 0.0
          %991 = vmatpush2.msra.mxu0 0.0
          %992 = vmatprep.mubr.f32.mxu0 0.0
          %993 = vmatmul.mubr.f32.gmra.mxu0 %v922
          %v994 = vpop.f32.mrf.mxu0
          %v995 = vadd.f32 0.0, %v994
          %v996 = vpop.f32.mrf.mxu0
          %997 = vdwg.mxu0
          %v998 = vmul.f32 %v995, %v820
          %v999 = vsel %vm577, %v998, 0.0
          %v1000 = vrot.slane %v999, 4
          %v1001 = vadd.f32 %v999, %v1000
          %v1002 = vrot.slane %v1001, 2
          %v1003 = vadd.f32 %v1001, %v1002
          %v1004 = vrot.slane %v1003, 1
          %v1005 = vadd.f32 %v1003, %v1004
          %v1006 = vld [vmem:[#allocation9] sm:$0xff]
          %v1007 = vld [vmem:[#allocation9 + $0x8] sm:$0xff]
          %v1008 = vld [vmem:[#allocation9 + $0x10] sm:$0xff]
          %v1009 = vld [vmem:[#allocation9 + $0x18] sm:$0xff]
          %v1010 = vld [vmem:[#allocation11] sm:$0x1]
          %v1012 = vsel %vm577, %v1005, 0
          %1014 = vmatprep.subr.mxu0 0.0
          %1015 = vmatpush1.msra.mxu0 0.0
          %1016 = vmatprep.subr.mxu0 0.0
          %1017 = vmatpush1.msra.mxu0 0.0
          %1018 = vmatprep.subr.mxu0 0.0
          %1019 = vmatpush1.msra.mxu0 0.0
          %1020 = vmatprep.subr.mxu0 0.0
          %1021 = vmatpush1.msra.mxu0 0.0
          %1022 = vmatprep.subr.mxu0 0.0
          %1023 = vmatpush1.msra.mxu0 0.0
          %1024 = vmatprep.subr.mxu0 0.0
          %1025 = vmatpush1.msra.mxu0 0.0
          %1026 = vmatprep.subr.mxu0 0.0
          %1027 = vmatpush1.msra.mxu0 0.0
          %1028 = vmatprep.subr.mxu0 0.0
          %1029 = vmatpush1.msra.mxu0 0.0
          %1030 = vmatprep.subr.mxu0 0.0
          %1031 = vmatpush1.msra.mxu0 0.0
          %1032 = vmatprep.subr.mxu0 0.0
          %1033 = vmatpush1.msra.mxu0 0.0
          %1034 = vmatprep.subr.mxu0 0.0
          %1035 = vmatpush1.msra.mxu0 0.0
          %1036 = vmatprep.subr.mxu0 0.0
          %1037 = vmatpush1.msra.mxu0 0.0
          %1038 = vmatprep.subr.mxu0 0.0
          %1039 = vmatpush1.msra.mxu0 %v1009
          %1040 = vmatprep.subr.mxu0 0.0
          %1041 = vmatpush1.msra.mxu0 %v1008
          %1042 = vmatprep.subr.mxu0 0.0
          %1043 = vmatpush1.msra.mxu0 %v1007
          %1044 = vmatprep.subr.mxu0 0.0
          %1045 = vmatpush1.msra.mxu0 %v1006
          %1046 = vmatprep.subr.mxu0 0.0
          %1047 = vmatpush2.msra.mxu0 0.0
          %1048 = vmatprep.subr.mxu0 0.0
          %1049 = vmatpush2.msra.mxu0 0.0
          %1050 = vmatprep.subr.mxu0 0.0
          %1051 = vmatpush2.msra.mxu0 0.0
          %1052 = vmatprep.subr.mxu0 0.0
          %1053 = vmatpush2.msra.mxu0 0.0
          %1054 = vmatprep.subr.mxu0 0.0
          %1055 = vmatpush2.msra.mxu0 0.0
          %1056 = vmatprep.subr.mxu0 0.0
          %1057 = vmatpush2.msra.mxu0 0.0
          %1058 = vmatprep.subr.mxu0 0.0
          %1059 = vmatpush2.msra.mxu0 0.0
          %1060 = vmatprep.subr.mxu0 0.0
          %1061 = vmatpush2.msra.mxu0 0.0
          %1062 = vmatprep.subr.mxu0 0.0
          %1063 = vmatpush2.msra.mxu0 0.0
          %1064 = vmatprep.subr.mxu0 0.0
          %1065 = vmatpush2.msra.mxu0 0.0
          %1066 = vmatprep.subr.mxu0 0.0
          %1067 = vmatpush2.msra.mxu0 0.0
          %1068 = vmatprep.subr.mxu0 0.0
          %1069 = vmatpush2.msra.mxu0 0.0
          %1070 = vmatprep.subr.mxu0 0.0
          %1071 = vmatpush2.msra.mxu0 0.0
          %1072 = vmatprep.subr.mxu0 0.0
          %1073 = vmatpush2.msra.mxu0 0.0
          %1074 = vmatprep.subr.mxu0 0.0
          %1075 = vmatpush2.msra.mxu0 0.0
          %1076 = vmatprep.subr.mxu0 0.0
          %1077 = vmatpush2.msra.mxu0 0.0
          %1078 = vmatprep.mubr.f32.mxu0 0.0
          %1079 = vmatmul.mubr.f32.gmra.mxu0 %v1012
          %v1080 = vpop.f32.mrf.mxu0
          %v1081 = vadd.f32 %v1010, %v1080
          %v1082 = vpop.f32.mrf.mxu0
          %1083 = vdwg.mxu0
          %vm1084 = vcmask 253952
          %1085 = vst.msk [vmem:[%s476] sm:$0x1] %vm1084, %v1081
        $region88: #{tpu_custom_call.1} parent=59 // pred_fallthru
          _
        %s1086 = sand.u32 %s278, 1
        %s1087 = scalar_lea.sflag [#allocation5], %s1086
        %s1088 = sand.u32 %s278, 1
        %s1089 = scalar_lea.vmem [#allocation12], %s1088
        // Predicated region
        $region89: #{tpu_custom_call.1} parent=59 // pred_check
          %p1090 = pneg %p288
        $region90: #{tpu_custom_call.1} parent=59 // pred_check_branch
          %1092 = sbr.rel (%p1090) target = $region92
        $region91: #{tpu_custom_call.1} parent=59 // pred_region
          %s1094 = ssub.s32 16, 16
          %1095 = vsyncadd %s1087, %s1094
          %s1096 = smul.addr %s35, 16
          %s1097 = scalar_lea.hbm %s10, %s1096
          %s1099 = sshll.u32 %s1089, 4
          %s1100 = int_to_ptr.vmem [resolvable:$true] %s1099
          %1102 = dma.vmem_to_hbm [thread:$0]  %s1100, 16, %s1097, %s1087
        $region92: #{tpu_custom_call.1} parent=59 // pred_fallthru
          _
      $region60: #{tpu_custom_call.1} parent=5 // pred_fallthru
        _
      %p1103 = scmp.le.s32.totalorder 2, %s26
      // Predicated region
      $region93: #{tpu_custom_call.1} parent=5 // pred_check
        %p1104 = pneg %p1103
      $region94: #{tpu_custom_call.1} parent=5 // pred_check_branch
        %1106 = sbr.rel (%p1104) target = $region96
      $region95: #{tpu_custom_call.1} parent=5 // pred_region
        %s1107 = ssub.s32 %s26, 2
        // Predicated region
        $region97: #{tpu_custom_call.1} parent=95 // pred_check
          %p1108 = pneg %p294
        $region98: #{tpu_custom_call.1} parent=95 // pred_check_branch
          %1110 = sbr.rel (%p1108) target = $region100
        $region99: #{tpu_custom_call.1} parent=95 // pred_region
          %s1111 = sand.u32 %s279, 1
          %s1112 = scalar_lea.sflag [#allocation5], %s1111
          %s1113 = sand.u32 %s279, 1
          %s1114 = scalar_lea.vmem [#allocation12], %s1113
          %1115 = dma.done %s1112, 16
        $region100: #{tpu_custom_call.1} parent=95 // pred_fallthru
          _
      $region96: #{tpu_custom_call.1} parent=5 // pred_fallthru
        _
    $region6: #{tpu_custom_call.1} parent=1 // loop_footer
      %s30 = sadd.s32 1, %s26
    $region7: #{tpu_custom_call.1} parent=1 // loop_footer_branch
      %25 = sbr.rel target = $region3
    $region8: #{tpu_custom_call.1} parent=1 // loop_exit
      _
    %1116 = vsyncpa [#allocation4], 1
    %s1117 = scalar_lea.sflag [#allocation4], 1
    %1118 = vsyncpa %s1117, 1
    %1119 = vsyncpa [#allocation7], 1
    %s1120 = scalar_lea.sflag [#allocation7], 1
    %1121 = vsyncpa %s1120, 1
    %1122 = vsyncpa [#allocation10], 1
    %1123 = vsyncpa [#allocation5], 1
    %s1124 = scalar_lea.sflag [#allocation5], 1
    %1125 = vsyncpa %s1124, 1

// kernel: tpu_custom_call.1
$region0: #{tpu_custom_call.1}
  #allocation0 [shape = 'u32[]', space=smem, size = 0x4, offset = 0x4, fixed_abs, tag = 'smem constant byte address 0x4 - core index']
  #allocation1 [shape = 'u32[144,128]{1,0:T(1,128)}', space=vmem, size = 0x12000, scoped, tag = 'internal scratch']
  #allocation2 [shape = 'f32[1,16,32]{2,1,0:T(8,128)}', space=vmem, size = 0x2000, scoped, tag = 'scratch operand']
  %s0 = inlined_call_operand.hbm [shape: f32[2,1,32], index: 0, kind: input, shape index: {}]
  %s1 = inlined_call_operand.hbm [shape: f32[2,8,32], index: 1, kind: input, shape index: {}]
  %s2 = inlined_call_operand.vmem [shape: f32[32,32], index: 2, kind: input, shape index: {}]
  %s3 = inlined_call_operand.vmem [shape: f32[32,32], index: 3, kind: input, shape index: {}]
  %s4 = inlined_call_operand.hbm [shape: f32[32,32], index: 4, kind: input, shape index: {}]
  %s5 = inlined_call_operand.vmem [shape: f32[16,8], index: 5, kind: input, shape index: {}]
  %s6 = inlined_call_operand.hbm [shape: f32[32,32], index: 6, kind: input, shape index: {}]
  %s7 = inlined_call_operand.hbm [shape: f32[1,32], index: 7, kind: input, shape index: {}]
  %s8 = inlined_call_operand.vmem [shape: f32[32,4], index: 8, kind: input, shape index: {}]
  %s9 = inlined_call_operand.vmem [shape: f32[4,32], index: 9, kind: input, shape index: {}]
  %s10 = inlined_call_operand.hbm [shape: f32[2,1,32], index: 10, kind: output, shape index: {}]
  %s11 = sld [smem:[#allocation0]]
  $region101: #{tpu_custom_call.1} parent=0
    _
  %s13 = ssub.s32 1, %s11
  %s14 = scalar_select 0, %s13, %s11
  $region1: #{tpu_custom_call.1} parent=0
    #allocation3 [shape = 'u8[1024]{0}', space=vmem, size = 0x400, scoped, tag = 'input window, operand 0']
    #allocation4 [shape = 's32[2]{0}', space=sflag, size = 0x8, scoped, tag = 'scoped memory for tpu_custom_call.1']
    #allocation5 [shape = 's32[2]{0}', space=sflag, size = 0x8, scoped, tag = 'scoped memory for tpu_custom_call.1']
    #allocation6 [shape = 'u8[8192]{0}', space=vmem, size = 0x2000, scoped, tag = 'input window, operand 1']
    #allocation7 [shape = 's32[2]{0}', space=sflag, size = 0x8, scoped, tag = 'scoped memory for tpu_custom_call.1']
    #allocation8 [shape = 'u8[16384]{0}', space=vmem, size = 0x4000, scoped, tag = 'input window, operand 4, single buffered']
    #allocation9 [shape = 'u8[16384]{0}', space=vmem, size = 0x4000, scoped, tag = 'input window, operand 6, single buffered']
    #allocation10 [shape = 's32[1]{0}', space=sflag, size = 0x4, scoped, tag = 'scoped memory for tpu_custom_call.1']
    #allocation11 [shape = 'u8[512]{0}', space=vmem, size = 0x400, scoped, tag = 'input window, operand 7, single buffered']
    #allocation12 [shape = 'u8[1024]{0}', space=vmem, size = 0x400, scoped, tag = 'output window, operand 0']
    %15 = vsyncpa [#allocation4], 0
    %s16 = scalar_lea.sflag [#allocation4], 1
    %17 = vsyncpa %s16, 0
    %18 = vsyncpa [#allocation7], 0
    %s19 = scalar_lea.sflag [#allocation7], 1
    %20 = vsyncpa %s19, 0
    %21 = vsyncpa [#allocation10], 0
    %22 = vsyncpa [#allocation5], 0
    %s23 = scalar_lea.sflag [#allocation5], 1
    %24 = vsyncpa %s23, 0
    loop: start=0, step=1, limit=4
    $region2: #{tpu_custom_call.1} parent=1 // loop_pre_header
      _
    $region3: #{tpu_custom_call.1} parent=1 // loop_header
      %s26 = sphi 0, %s30
      %p27 = scmp.ge.s32.totalorder %s26, 4
      %s33 = sphi 0, %s45
      %s34 = sphi 0, %s41
      %s35 = sphi 0, %s33
      %s36 = sphi 0, %s34
      %s37 = sphi 0, %s35
      %s38 = sphi 0, %s36
      %s48 = sphi 0, %s50
      %s51 = sphi 0, %s48
      %s52 = sphi 0, %s51
      %s68 = sphi 0, %s52
      %s76 = sphi 0, %s78
      %s79 = sphi 0, %s76
      %s80 = sphi 0, %s79
      %s96 = sphi 0, %s80
      %s100 = sphi 0, %s100
      %s102 = sphi 0, %s100
      %s103 = sphi 0, %s102
      %s117 = sphi 0, %s103
      %s121 = sphi 0, %s121
      %s123 = sphi 0, %s121
      %s124 = sphi 0, %s123
      %s138 = sphi 0, %s124
      %s142 = sphi 0, %s142
      %s144 = sphi 0, %s142
      %s145 = sphi 0, %s144
      %s159 = sphi 0, %s145
      %s165 = sphi 0, %s167
      %s168 = sphi 0, %s165
      %s169 = sphi 0, %s168
      %s185 = sphi 0, %s169
      %s189 = sphi 0, %s189
      %s191 = sphi 0, %s189
      %s192 = sphi 0, %s191
      %s206 = sphi 0, %s192
      %s210 = sphi 0, %s210
      %s212 = sphi 0, %s210
      %s213 = sphi 0, %s212
      %s227 = sphi 0, %s213
      %s231 = sphi 0, %s231
      %s233 = sphi 0, %s231
      %s234 = sphi 0, %s233
      %s248 = sphi 0, %s234
      %s252 = sphi 0, %s252
      %s254 = sphi 0, %s252
      %s255 = sphi 0, %s254
      %s269 = sphi 0, %s255
      %s275 = sphi 0, %s277
      %s278 = sphi 0, %s275
      %s279 = sphi 0, %s278
      %s295 = sphi 0, %s279
    $region4: #{tpu_custom_call.1} parent=1 // loop_header_branch
      %29 = sbr.rel (%p27) target = $region8
    $region5: #{tpu_custom_call.1} parent=1 // loop_body
      %s31 = ssub.s32 %s26, 1
      %s32 = ssub.s32 %s26, 2
      %s39 = sadd.s32 1, %s34
      %p40 = scmp.ge.s32.totalorder %s39, 1
      %s41 = scalar_select %p40, 0, %s39
      %s42 = sadd.s32 1, %s33
      %s43 = scalar_select %p40, %s42, %s33
      %p44 = scmp.ge.s32.totalorder %s43, 2
      %s45 = scalar_select %p44, 0, %s43
      %s46 = ssub.s32 %s33, %s45
      %p47 = scmp.eq.s32.totalorder %s46, 0
      %s49 = sadd.s32 %s48, 1
      %s50 = scalar_select %p47, %s48, %s49
      %p53 = pneg %p47
      %p54 = scmp.eq.s32.totalorder %s26, 1
      %p55 = por %p53, %p54
      %p56 = scmp.ne.s32.totalorder %s48, %s51
      %p57 = scmp.eq.s32.totalorder %s26, 0
      %p58 = por %p56, %p57
      %p59 = scmp.ne.s32.totalorder %s48, %s51
      %p60 = scmp.eq.s32.totalorder %s31, 1
      %p61 = por %p59, %p60
      %p62 = scmp.ne.s32.totalorder %s51, %s52
      %p63 = scmp.eq.s32.totalorder %s31, 0
      %p64 = por %p62, %p63
      %p65 = scmp.ne.s32.totalorder %s51, %s52
      %p66 = scmp.eq.s32.totalorder %s32, 1
      %p67 = por %p65, %p66
      %p69 = scmp.ne.s32.totalorder %s52, %s68
      %p70 = scmp.eq.s32.totalorder %s32, 0
      %p71 = por %p69, %p70
      %s72 = ssub.s32 %s33, %s45
      %s73 = ssub.s32 %s34, %s41
      %s74 = sor.u32 %s72, %s73
      %p75 = scmp.eq.s32.totalorder %s74, 0
      %s77 = sadd.s32 %s76, 1
      %s78 = scalar_select %p75, %s76, %s77
      %p81 = pneg %p75
      %p82 = scmp.eq.s32.totalorder %s26, 1
      %p83 = por %p81, %p82
      %p84 = scmp.ne.s32.totalorder %s76, %s79
      %p85 = scmp.eq.s32.totalorder %s26, 0
      %p86 = por %p84, %p85
      %p87 = scmp.ne.s32.totalorder %s76, %s79
      %p88 = scmp.eq.s32.totalorder %s31, 1
      %p89 = por %p87, %p88
      %p90 = scmp.ne.s32.totalorder %s79, %s80
      %p91 = scmp.eq.s32.totalorder %s31, 0
      %p92 = por %p90, %p91
      %p93 = scmp.ne.s32.totalorder %s79, %s80
      %p94 = scmp.eq.s32.totalorder %s32, 1
      %p95 = por %p93, %p94
      %p97 = scmp.ne.s32.totalorder %s80, %s96
      %p98 = scmp.eq.s32.totalorder %s32, 0
      %p99 = por %p97, %p98
      %s101 = sadd.s32 %s100, 1
      %p104 = scmp.eq.s32.totalorder %s26, 1
      %p105 = scmp.ne.s32.totalorder %s100, %s102
      %p106 = scmp.eq.s32.totalorder %s26, 0
      %p107 = por %p105, %p106
      %p108 = scmp.ne.s32.totalorder %s100, %s102
      %p109 = scmp.eq.s32.totalorder %s31, 1
      %p110 = por %p108, %p109
      %p111 = scmp.ne.s32.totalorder %s102, %s103
      %p112 = scmp.eq.s32.totalorder %s31, 0
      %p113 = por %p111, %p112
      %p114 = scmp.ne.s32.totalorder %s102, %s103
      %p115 = scmp.eq.s32.totalorder %s32, 1
      %p116 = por %p114, %p115
      %p118 = scmp.ne.s32.totalorder %s103, %s117
      %p119 = scmp.eq.s32.totalorder %s32, 0
      %p120 = por %p118, %p119
      %s122 = sadd.s32 %s121, 1
      %p125 = scmp.eq.s32.totalorder %s26, 1
      %p126 = scmp.ne.s32.totalorder %s121, %s123
      %p127 = scmp.eq.s32.totalorder %s26, 0
      %p128 = por %p126, %p127
      %p129 = scmp.ne.s32.totalorder %s121, %s123
      %p130 = scmp.eq.s32.totalorder %s31, 1
      %p131 = por %p129, %p130
      %p132 = scmp.ne.s32.totalorder %s123, %s124
      %p133 = scmp.eq.s32.totalorder %s31, 0
      %p134 = por %p132, %p133
      %p135 = scmp.ne.s32.totalorder %s123, %s124
      %p136 = scmp.eq.s32.totalorder %s32, 1
      %p137 = por %p135, %p136
      %p139 = scmp.ne.s32.totalorder %s124, %s138
      %p140 = scmp.eq.s32.totalorder %s32, 0
      %p141 = por %p139, %p140
      %s143 = sadd.s32 %s142, 1
      %p146 = scmp.eq.s32.totalorder %s26, 1
      %p147 = scmp.ne.s32.totalorder %s142, %s144
      %p148 = scmp.eq.s32.totalorder %s26, 0
      %p149 = por %p147, %p148
      %p150 = scmp.ne.s32.totalorder %s142, %s144
      %p151 = scmp.eq.s32.totalorder %s31, 1
      %p152 = por %p150, %p151
      %p153 = scmp.ne.s32.totalorder %s144, %s145
      %p154 = scmp.eq.s32.totalorder %s31, 0
      %p155 = por %p153, %p154
      %p156 = scmp.ne.s32.totalorder %s144, %s145
      %p157 = scmp.eq.s32.totalorder %s32, 1
      %p158 = por %p156, %p157
      %p160 = scmp.ne.s32.totalorder %s145, %s159
      %p161 = scmp.eq.s32.totalorder %s32, 0
      %p162 = por %p160, %p161
      %s163 = ssub.s32 %s34, %s41
      %p164 = scmp.eq.s32.totalorder %s163, 0
      %s166 = sadd.s32 %s165, 1
      %s167 = scalar_select %p164, %s165, %s166
      %p170 = pneg %p164
      %p171 = scmp.eq.s32.totalorder %s26, 1
      %p172 = por %p170, %p171
      %p173 = scmp.ne.s32.totalorder %s165, %s168
      %p174 = scmp.eq.s32.totalorder %s26, 0
      %p175 = por %p173, %p174
      %p176 = scmp.ne.s32.totalorder %s165, %s168
      %p177 = scmp.eq.s32.totalorder %s31, 1
      %p178 = por %p176, %p177
      %p179 = scmp.ne.s32.totalorder %s168, %s169
      %p180 = scmp.eq.s32.totalorder %s31, 0
      %p181 = por %p179, %p180
      %p182 = scmp.ne.s32.totalorder %s168, %s169
      %p183 = scmp.eq.s32.totalorder %s32, 1
      %p184 = por %p182, %p183
      %p186 = scmp.ne.s32.totalorder %s169, %s185
      %p187 = scmp.eq.s32.totalorder %s32, 0
      %p188 = por %p186, %p187
      %s190 = sadd.s32 %s189, 1
      %p193 = scmp.eq.s32.totalorder %s26, 1
      %p194 = scmp.ne.s32.totalorder %s189, %s191
      %p195 = scmp.eq.s32.totalorder %s26, 0
      %p196 = por %p194, %p195
      %p197 = scmp.ne.s32.totalorder %s189, %s191
      %p198 = scmp.eq.s32.totalorder %s31, 1
      %p199 = por %p197, %p198
      %p200 = scmp.ne.s32.totalorder %s191, %s192
      %p201 = scmp.eq.s32.totalorder %s31, 0
      %p202 = por %p200, %p201
      %p203 = scmp.ne.s32.totalorder %s191, %s192
      %p204 = scmp.eq.s32.totalorder %s32, 1
      %p205 = por %p203, %p204
      %p207 = scmp.ne.s32.totalorder %s192, %s206
      %p208 = scmp.eq.s32.totalorder %s32, 0
      %p209 = por %p207, %p208
      %s211 = sadd.s32 %s210, 1
      %p214 = scmp.eq.s32.totalorder %s26, 1
      %p215 = scmp.ne.s32.totalorder %s210, %s212
      %p216 = scmp.eq.s32.totalorder %s26, 0
      %p217 = por %p215, %p216
      %p218 = scmp.ne.s32.totalorder %s210, %s212
      %p219 = scmp.eq.s32.totalorder %s31, 1
      %p220 = por %p218, %p219
      %p221 = scmp.ne.s32.totalorder %s212, %s213
      %p222 = scmp.eq.s32.totalorder %s31, 0
      %p223 = por %p221, %p222
      %p224 = scmp.ne.s32.totalorder %s212, %s213
      %p225 = scmp.eq.s32.totalorder %s32, 1
      %p226 = por %p224, %p225
      %p228 = scmp.ne.s32.totalorder %s213, %s227
      %p229 = scmp.eq.s32.totalorder %s32, 0
      %p230 = por %p228, %p229
      %s232 = sadd.s32 %s231, 1
      %p235 = scmp.eq.s32.totalorder %s26, 1
      %p236 = scmp.ne.s32.totalorder %s231, %s233
      %p237 = scmp.eq.s32.totalorder %s26, 0
      %p238 = por %p236, %p237
      %p239 = scmp.ne.s32.totalorder %s231, %s233
      %p240 = scmp.eq.s32.totalorder %s31, 1
      %p241 = por %p239, %p240
      %p242 = scmp.ne.s32.totalorder %s233, %s234
      %p243 = scmp.eq.s32.totalorder %s31, 0
      %p244 = por %p242, %p243
      %p245 = scmp.ne.s32.totalorder %s233, %s234
      %p246 = scmp.eq.s32.totalorder %s32, 1
      %p247 = por %p245, %p246
      %p249 = scmp.ne.s32.totalorder %s234, %s248
      %p250 = scmp.eq.s32.totalorder %s32, 0
      %p251 = por %p249, %p250
      %s253 = sadd.s32 %s252, 1
      %p256 = scmp.eq.s32.totalorder %s26, 1
      %p257 = scmp.ne.s32.totalorder %s252, %s254
      %p258 = scmp.eq.s32.totalorder %s26, 0
      %p259 = por %p257, %p258
      %p260 = scmp.ne.s32.totalorder %s252, %s254
      %p261 = scmp.eq.s32.totalorder %s31, 1
      %p262 = por %p260, %p261
      %p263 = scmp.ne.s32.totalorder %s254, %s255
      %p264 = scmp.eq.s32.totalorder %s31, 0
      %p265 = por %p263, %p264
      %p266 = scmp.ne.s32.totalorder %s254, %s255
      %p267 = scmp.eq.s32.totalorder %s32, 1
      %p268 = por %p266, %p267
      %p270 = scmp.ne.s32.totalorder %s255, %s269
      %p271 = scmp.eq.s32.totalorder %s32, 0
      %p272 = por %p270, %p271
      %s273 = ssub.s32 %s33, %s45
      %p274 = scmp.eq.s32.totalorder %s273, 0
      %s276 = sadd.s32 %s275, 1
      %s277 = scalar_select %p274, %s275, %s276
      %p280 = pneg %p274
      %p281 = scmp.eq.s32.totalorder %s26, 1
      %p282 = por %p280, %p281
      %p283 = scmp.ne.s32.totalorder %s275, %s278
      %p284 = scmp.eq.s32.totalorder %s26, 0
      %p285 = por %p283, %p284
      %p286 = scmp.ne.s32.totalorder %s275, %s278
      %p287 = scmp.eq.s32.totalorder %s31, 1
      %p288 = por %p286, %p287
      %p289 = scmp.ne.s32.totalorder %s278, %s279
      %p290 = scmp.eq.s32.totalorder %s31, 0
      %p291 = por %p289, %p290
      %p292 = scmp.ne.s32.totalorder %s278, %s279
      %p293 = scmp.eq.s32.totalorder %s32, 1
      %p294 = por %p292, %p293
      %p296 = scmp.ne.s32.totalorder %s279, %s295
      %p297 = scmp.eq.s32.totalorder %s32, 0
      %p298 = por %p296, %p297
      %p299 = scmp.le.s32.totalorder 1, %s26
      %p300 = scmp.lt.s32.totalorder %s26, 3
      %p301 = pnand %p299, %p300
      %p302 = pneg %p301
      // Predicated region
      $region9: #{tpu_custom_call.1} parent=5 // pred_check
        _
      $region10: #{tpu_custom_call.1} parent=5 // pred_check_branch
        %304 = sbr.rel (%p301) target = $region12
      $region11: #{tpu_custom_call.1} parent=5 // pred_region
        %s305 = ssub.s32 %s26, 1
        // Predicated region
        $region13: #{tpu_custom_call.1} parent=11 // pred_check
          %p306 = pneg %p113
        $region14: #{tpu_custom_call.1} parent=11 // pred_check_branch
          %308 = sbr.rel (%p306) target = $region16
        $region15: #{tpu_custom_call.1} parent=11 // pred_region
          _
        $region16: #{tpu_custom_call.1} parent=11 // pred_fallthru
          _
        // Predicated region
        $region17: #{tpu_custom_call.1} parent=11 // pred_check
          %p309 = pneg %p134
        $region18: #{tpu_custom_call.1} parent=11 // pred_check_branch
          %311 = sbr.rel (%p309) target = $region20
        $region19: #{tpu_custom_call.1} parent=11 // pred_region
          _
        $region20: #{tpu_custom_call.1} parent=11 // pred_fallthru
          _
        // Predicated region
        $region21: #{tpu_custom_call.1} parent=11 // pred_check
          %p312 = pneg %p155
        $region22: #{tpu_custom_call.1} parent=11 // pred_check_branch
          %314 = sbr.rel (%p312) target = $region24
        $region23: #{tpu_custom_call.1} parent=11 // pred_region
          %s316 = ssub.s32 512, 512
          %317 = vsyncadd [#allocation7], %s316
          %s318 = sshll.u32 [#allocation8], 4
          %s319 = int_to_ptr.vmem [resolvable:$true] %s318
          %324 = dma.hbm_to_vmem [thread:$0]  %s4, 512, %s319, [#allocation7], 128, 128, 8
        $region24: #{tpu_custom_call.1} parent=11 // pred_fallthru
          _
        // Predicated region
        $region25: #{tpu_custom_call.1} parent=11 // pred_check
          %p325 = pneg %p181
        $region26: #{tpu_custom_call.1} parent=11 // pred_check_branch
          %327 = sbr.rel (%p325) target = $region28
        $region27: #{tpu_custom_call.1} parent=11 // pred_region
          %p328 = scmp.lt.s32.totalorder %s36, 0
          %s329 = scalar_select %p328, %s36, 0
          %s330 = smul.addr %s329, 8
          %s331 = scalar_lea.vmem %s5, %s330
        $region28: #{tpu_custom_call.1} parent=11 // pred_fallthru
          _
        // Predicated region
        $region29: #{tpu_custom_call.1} parent=11 // pred_check
          %p332 = pneg %p202
        $region30: #{tpu_custom_call.1} parent=11 // pred_check_branch
          %334 = sbr.rel (%p332) target = $region32
        $region31: #{tpu_custom_call.1} parent=11 // pred_region
          %s336 = ssub.s32 512, 512
          %337 = vsyncadd [#allocation10], %s336
          %s338 = sshll.u32 [#allocation9], 4
          %s339 = int_to_ptr.vmem [resolvable:$true] %s338
          %344 = dma.hbm_to_vmem [thread:$0]  %s6, 512, %s339, [#allocation10], 128, 128, 8
        $region32: #{tpu_custom_call.1} parent=11 // pred_fallthru
          _
        // Predicated region
        $region33: #{tpu_custom_call.1} parent=11 // pred_check
          %p345 = pneg %p223
        $region34: #{tpu_custom_call.1} parent=11 // pred_check_branch
          %347 = sbr.rel (%p345) target = $region36
        $region35: #{tpu_custom_call.1} parent=11 // pred_region
          %s349 = ssub.s32 16, 16
          %350 = vsyncadd [#allocation10], %s349
          %s352 = sshll.u32 [#allocation11], 4
          %s353 = int_to_ptr.vmem [resolvable:$true] %s352
          %355 = dma.hbm_to_vmem [thread:$0]  %s7, 16, %s353, [#allocation10]
        $region36: #{tpu_custom_call.1} parent=11 // pred_fallthru
          _
        // Predicated region
        $region37: #{tpu_custom_call.1} parent=11 // pred_check
          %p356 = pneg %p244
        $region38: #{tpu_custom_call.1} parent=11 // pred_check_branch
          %358 = sbr.rel (%p356) target = $region40
        $region39: #{tpu_custom_call.1} parent=11 // pred_region
          _
        $region40: #{tpu_custom_call.1} parent=11 // pred_fallthru
          _
        // Predicated region
        $region41: #{tpu_custom_call.1} parent=11 // pred_check
          %p359 = pneg %p265
        $region42: #{tpu_custom_call.1} parent=11 // pred_check_branch
          %361 = sbr.rel (%p359) target = $region44
        $region43: #{tpu_custom_call.1} parent=11 // pred_region
          _
        $region44: #{tpu_custom_call.1} parent=11 // pred_fallthru
          _
      $region12: #{tpu_custom_call.1} parent=5 // pred_fallthru
        _
      %p362 = scmp.lt.s32.totalorder %s26, 2
      // Predicated region
      $region45: #{tpu_custom_call.1} parent=5 // pred_check
        %p363 = pneg %p362
      $region46: #{tpu_custom_call.1} parent=5 // pred_check_branch
        %365 = sbr.rel (%p363) target = $region48
      $region47: #{tpu_custom_call.1} parent=5 // pred_region
        // Predicated region
        $region49: #{tpu_custom_call.1} parent=47 // pred_check
          %p366 = pneg %p58
        $region50: #{tpu_custom_call.1} parent=47 // pred_check_branch
          %368 = sbr.rel (%p366) target = $region52
        $region51: #{tpu_custom_call.1} parent=47 // pred_region
          %s369 = sand.u32 %s48, 1
          %s370 = scalar_lea.sflag [#allocation4], %s369
          %s371 = sand.u32 %s48, 1
          %s372 = scalar_lea.vmem [#allocation3], %s371
          %s374 = ssub.s32 16, 16
          %375 = vsyncadd %s370, %s374
          %s376 = smul.addr %s33, 16
          %s377 = scalar_lea.hbm %s0, %s376
          %s379 = sshll.u32 %s372, 4
          %s380 = int_to_ptr.vmem [resolvable:$true] %s379
          %382 = dma.hbm_to_vmem [thread:$0]  %s377, 16, %s380, %s370
        $region52: #{tpu_custom_call.1} parent=47 // pred_fallthru
          _
        // Predicated region
        $region53: #{tpu_custom_call.1} parent=47 // pred_check
          %p383 = pneg %p86
        $region54: #{tpu_custom_call.1} parent=47 // pred_check_branch
          %385 = sbr.rel (%p383) target = $region56
        $region55: #{tpu_custom_call.1} parent=47 // pred_region
          %s386 = sand.u32 %s26, 1
          %s387 = scalar_lea.sflag [#allocation7], %s386
          %s388 = sand.u32 %s76, 1
          %s389 = smul.addr %s388, 8
          %s390 = scalar_lea.vmem [#allocation6], %s389
          %s392 = ssub.s32 128, 128
          %393 = vsyncadd %s387, %s392
          %s394 = sadd.s32 %s34, %s33
          %s395 = smul.addr %s394, 128
          %s396 = scalar_lea.hbm %s1, %s395
          %s398 = sshll.u32 %s390, 4
          %s399 = int_to_ptr.vmem [resolvable:$true] %s398
          %401 = dma.hbm_to_vmem [thread:$0]  %s396, 128, %s399, %s387
        $region56: #{tpu_custom_call.1} parent=47 // pred_fallthru
          _
      $region48: #{tpu_custom_call.1} parent=5 // pred_fallthru
        _
      %p402 = scmp.le.s32.totalorder 1, %s26
      %p403 = scmp.lt.s32.totalorder %s26, 3
      %p404 = pnand %p402, %p403
      %p405 = pneg %p404
      // Predicated region
      $region57: #{tpu_custom_call.1} parent=5 // pred_check
        _
      $region58: #{tpu_custom_call.1} parent=5 // pred_check_branch
        %407 = sbr.rel (%p404) target = $region60
      $region59: #{tpu_custom_call.1} parent=5 // pred_region
        %s408 = ssub.s32 %s26, 1
        %s409 = sand.u32 %s51, 1
        %s410 = scalar_lea.sflag [#allocation4], %s409
        %s411 = sand.u32 %s51, 1
        %s412 = scalar_lea.vmem [#allocation3], %s411
        // Predicated region
        $region61: #{tpu_custom_call.1} parent=59 // pred_check
          %p413 = pneg %p64
        $region62: #{tpu_custom_call.1} parent=59 // pred_check_branch
          %415 = sbr.rel (%p413) target = $region64
        $region63: #{tpu_custom_call.1} parent=59 // pred_region
          %416 = dma.done %s410, 16
        $region64: #{tpu_custom_call.1} parent=59 // pred_fallthru
          _
        %s417 = sand.u32 %s31, 1
        %s418 = scalar_lea.sflag [#allocation7], %s417
        %s419 = sand.u32 %s79, 1
        %s420 = smul.addr %s419, 8
        %s421 = scalar_lea.vmem [#allocation6], %s420
        // Predicated region
        $region65: #{tpu_custom_call.1} parent=59 // pred_check
          %p422 = pneg %p92
        $region66: #{tpu_custom_call.1} parent=59 // pred_check_branch
          %424 = sbr.rel (%p422) target = $region68
        $region67: #{tpu_custom_call.1} parent=59 // pred_region
          %425 = dma.done %s418, 128
        $region68: #{tpu_custom_call.1} parent=59 // pred_fallthru
          _
        // Predicated region
        $region69: #{tpu_custom_call.1} parent=59 // pred_check
          %p426 = pneg %p155
        $region70: #{tpu_custom_call.1} parent=59 // pred_check_branch
          %428 = sbr.rel (%p426) target = $region72
        $region71: #{tpu_custom_call.1} parent=59 // pred_region
          %429 = dma.done [#allocation7], 512
        $region72: #{tpu_custom_call.1} parent=59 // pred_fallthru
          _
        // Predicated region
        $region73: #{tpu_custom_call.1} parent=59 // pred_check
          %p430 = pneg %p202
        $region74: #{tpu_custom_call.1} parent=59 // pred_check_branch
          %432 = sbr.rel (%p430) target = $region76
        $region75: #{tpu_custom_call.1} parent=59 // pred_region
          %433 = dma.done [#allocation10], 512
        $region76: #{tpu_custom_call.1} parent=59 // pred_fallthru
          _
        // Predicated region
        $region77: #{tpu_custom_call.1} parent=59 // pred_check
          %p434 = pneg %p223
        $region78: #{tpu_custom_call.1} parent=59 // pred_check_branch
          %436 = sbr.rel (%p434) target = $region80
        $region79: #{tpu_custom_call.1} parent=59 // pred_region
          %437 = dma.done [#allocation10], 16
        $region80: #{tpu_custom_call.1} parent=59 // pred_fallthru
          _
        %s438 = sand.u32 %s51, 1
        %s439 = scalar_lea.sflag [#allocation4], %s438
        %s440 = sand.u32 %s51, 1
        %s441 = scalar_lea.vmem [#allocation3], %s440
        %p442 = pneg %p64
        %p443 = pneg %p61
        %s444 = sand.u32 %s31, 1
        %s445 = scalar_lea.sflag [#allocation7], %s444
        %s446 = sand.u32 %s79, 1
        %s447 = smul.addr %s446, 8
        %s448 = scalar_lea.vmem [#allocation6], %s447
        %p449 = pneg %p92
        %p450 = pneg %p89
        %p451 = pneg %p113
        %p452 = pneg %p110
        %p453 = pneg %p134
        %p454 = pneg %p131
        %p455 = pneg %p155
        %p456 = pneg %p152
        %p457 = scmp.lt.s32.totalorder %s36, 0
        %s458 = scalar_select %p457, %s36, 0
        %s459 = smul.addr %s458, 8
        %s460 = scalar_lea.vmem %s5, %s459
        %p461 = pneg %p181
        %p462 = pneg %p178
        %p463 = pneg %p202
        %p464 = pneg %p199
        %p465 = pneg %p223
        %p466 = pneg %p220
        %p467 = pneg %p244
        %p468 = pneg %p241
        %p469 = pneg %p265
        %p470 = pneg %p262
        %p471 = pneg %p291
        %p472 = pneg %p288
        %s473 = sand.u32 %s278, 1
        %s474 = scalar_lea.sflag [#allocation5], %s473
        %s475 = sand.u32 %s278, 1
        %s476 = scalar_lea.vmem [#allocation12], %s475
        %p477 = scmp.lt.s32.totalorder %s36, 0
        %s478 = scalar_select %p477, %s36, 0
        %s479 = smul.addr %s478, 8
        %s480 = scalar_lea.vmem %s5, %s479
        %p481 = scmp.eq.s32.totalorder %s36, 0
        // Predicated region
        $region81: #{tpu_custom_call.1} parent=59 // pred_check
          %p482 = pneg %p481
        $region82: #{tpu_custom_call.1} parent=59 // pred_check_branch
          %484 = sbr.rel (%p482) target = $region84
        $region83: #{tpu_custom_call.1} parent=59 // pred_region
          %vm485 = vcmask 261120
          %486 = vst.msk [vmem:[#allocation2] sm:$0xff] %vm485, 0.0
          %487 = vst.msk [vmem:[#allocation2 + $0x8] sm:$0xff] %vm485, 0.0
        $region84: #{tpu_custom_call.1} parent=59 // pred_fallthru
          _
        %v488 = vld [vmem:[%s480] sm:$0xff]
        %v489 = vld [vmem:[%s480 + $0x8] sm:$0xff]
        %v490 = vld [vmem:[#allocation2] sm:$0xff]
        %v491 = vld [vmem:[#allocation2 + $0x8] sm:$0xff]
        %v492 = vld [vmem:[%s421] sm:$0xff]
        %vm493 = vcmask 64512
        %v495 = vsel %vm493, %v488, 0
        %v498 = vsel %vm493, %v489, 0
        %500 = vmatprep.subr.mxu0 0.0
        %501 = vmatpush1.msra.mxu0 0.0
        %502 = vmatprep.subr.mxu0 0.0
        %503 = vmatpush1.msra.mxu0 0.0
        %504 = vmatprep.subr.mxu0 0.0
        %505 = vmatpush1.msra.mxu0 0.0
        %506 = vmatprep.subr.mxu0 0.0
        %507 = vmatpush1.msra.mxu0 0.0
        %508 = vmatprep.subr.mxu0 0.0
        %509 = vmatpush1.msra.mxu0 0.0
        %510 = vmatprep.subr.mxu0 0.0
        %511 = vmatpush1.msra.mxu0 0.0
        %512 = vmatprep.subr.mxu0 0.0
        %513 = vmatpush1.msra.mxu0 0.0
        %514 = vmatprep.subr.mxu0 0.0
        %515 = vmatpush1.msra.mxu0 0.0
        %516 = vmatprep.subr.mxu0 0.0
        %517 = vmatpush1.msra.mxu0 0.0
        %518 = vmatprep.subr.mxu0 0.0
        %519 = vmatpush1.msra.mxu0 0.0
        %520 = vmatprep.subr.mxu0 0.0
        %521 = vmatpush1.msra.mxu0 0.0
        %522 = vmatprep.subr.mxu0 0.0
        %523 = vmatpush1.msra.mxu0 0.0
        %524 = vmatprep.subr.mxu0 0.0
        %525 = vmatpush1.msra.mxu0 0.0
        %526 = vmatprep.subr.mxu0 0.0
        %527 = vmatpush1.msra.mxu0 0.0
        %528 = vmatprep.subr.mxu0 0.0
        %529 = vmatpush1.msra.mxu0 0.0
        %530 = vmatprep.subr.mxu0 0.0
        %531 = vmatpush1.msra.mxu0 %v492
        %532 = vmatprep.subr.mxu0 0.0
        %533 = vmatpush2.msra.mxu0 0.0
        %534 = vmatprep.subr.mxu0 0.0
        %535 = vmatpush2.msra.mxu0 0.0
        %536 = vmatprep.subr.mxu0 0.0
        %537 = vmatpush2.msra.mxu0 0.0
        %538 = vmatprep.subr.mxu0 0.0
        %539 = vmatpush2.msra.mxu0 0.0
        %540 = vmatprep.subr.mxu0 0.0
        %541 = vmatpush2.msra.mxu0 0.0
        %542 = vmatprep.subr.mxu0 0.0
        %543 = vmatpush2.msra.mxu0 0.0
        %544 = vmatprep.subr.mxu0 0.0
        %545 = vmatpush2.msra.mxu0 0.0
        %546 = vmatprep.subr.mxu0 0.0
        %547 = vmatpush2.msra.mxu0 0.0
        %548 = vmatprep.subr.mxu0 0.0
        %549 = vmatpush2.msra.mxu0 0.0
        %550 = vmatprep.subr.mxu0 0.0
        %551 = vmatpush2.msra.mxu0 0.0
        %552 = vmatprep.subr.mxu0 0.0
        %553 = vmatpush2.msra.mxu0 0.0
        %554 = vmatprep.subr.mxu0 0.0
        %555 = vmatpush2.msra.mxu0 0.0
        %556 = vmatprep.subr.mxu0 0.0
        %557 = vmatpush2.msra.mxu0 0.0
        %558 = vmatprep.subr.mxu0 0.0
        %559 = vmatpush2.msra.mxu0 0.0
        %560 = vmatprep.subr.mxu0 0.0
        %561 = vmatpush2.msra.mxu0 0.0
        %562 = vmatprep.subr.mxu0 0.0
        %563 = vmatpush2.msra.mxu0 0.0
        %564 = vmatprep.mubr.f32.mxu0 0.0
        %565 = vmatmul.mubr.f32.gmra.mxu0 %v495
        %v566 = vpop.f32.mrf.mxu0
        %v567 = vadd.f32 0.0, %v566
        %v568 = vpop.f32.mrf.mxu0
        %569 = vmatprep.mubr.f32.mxu0 0.0
        %570 = vmatmul.mubr.f32.gmra.mxu0 %v498
        %v571 = vpop.f32.mrf.mxu0
        %v572 = vadd.f32 0.0, %v571
        %v573 = vpop.f32.mrf.mxu0
        %574 = vdwg.mxu0
        %v575 = vadd.f32 %v490, %v567
        %v576 = vadd.f32 %v491, %v572
        %vm577 = vcmask 261120
        %578 = vst.msk [vmem:[#allocation2] sm:$0xff] %vm577, %v575
        %579 = vst.msk [vmem:[#allocation2 + $0x8] sm:$0xff] %vm577, %v576
        // Predicated region
        $region85: #{tpu_custom_call.1} parent=59 // pred_check
          %p580 = pneg %p481
        $region86: #{tpu_custom_call.1} parent=59 // pred_check_branch
          %582 = sbr.rel (%p580) target = $region88
        $region87: #{tpu_custom_call.1} parent=59 // pred_region
          %v583 = vld [vmem:[%s8] sm:$0xff]
          %v584 = vld [vmem:[%s8 + $0x8] sm:$0xff]
          %v585 = vld [vmem:[%s8 + $0x10] sm:$0xff]
          %v586 = vld [vmem:[%s8 + $0x18] sm:$0xff]
          %v587 = vld [vmem:[%s9] sm:$0xf]
          %v588 = vld [vmem:[%s412] sm:$0x1]
          %v589 = vld [vmem:[%s2] sm:$0xff]
          %v590 = vld [vmem:[%s2 + $0x8] sm:$0xff]
          %v591 = vld [vmem:[%s2 + $0x10] sm:$0xff]
          %v592 = vld [vmem:[%s2 + $0x18] sm:$0xff]
          %v594 = vsel %vm577, %v588, 0
          %596 = vmatprep.subr.mxu0 0.0
          %597 = vmatpush1.msra.mxu0 0.0
          %598 = vmatprep.subr.mxu0 0.0
          %599 = vmatpush1.msra.mxu0 0.0
          %600 = vmatprep.subr.mxu0 0.0
          %601 = vmatpush1.msra.mxu0 0.0
          %602 = vmatprep.subr.mxu0 0.0
          %603 = vmatpush1.msra.mxu0 0.0
          %604 = vmatprep.subr.mxu0 0.0
          %605 = vmatpush1.msra.mxu0 0.0
          %606 = vmatprep.subr.mxu0 0.0
          %607 = vmatpush1.msra.mxu0 0.0
          %608 = vmatprep.subr.mxu0 0.0
          %609 = vmatpush1.msra.mxu0 0.0
          %610 = vmatprep.subr.mxu0 0.0
          %611 = vmatpush1.msra.mxu0 0.0
          %612 = vmatprep.subr.mxu0 0.0
          %613 = vmatpush1.msra.mxu0 0.0
          %614 = vmatprep.subr.mxu0 0.0
          %615 = vmatpush1.msra.mxu0 0.0
          %616 = vmatprep.subr.mxu0 0.0
          %617 = vmatpush1.msra.mxu0 0.0
          %618 = vmatprep.subr.mxu0 0.0
          %619 = vmatpush1.msra.mxu0 0.0
          %620 = vmatprep.subr.mxu0 0.0
          %621 = vmatpush1.msra.mxu0 %v592
          %622 = vmatprep.subr.mxu0 0.0
          %623 = vmatpush1.msra.mxu0 %v591
          %624 = vmatprep.subr.mxu0 0.0
          %625 = vmatpush1.msra.mxu0 %v590
          %626 = vmatprep.subr.mxu0 0.0
          %627 = vmatpush1.msra.mxu0 %v589
          %628 = vmatprep.subr.mxu0 0.0
          %629 = vmatpush2.msra.mxu0 0.0
          %630 = vmatprep.subr.mxu0 0.0
          %631 = vmatpush2.msra.mxu0 0.0
          %632 = vmatprep.subr.mxu0 0.0
          %633 = vmatpush2.msra.mxu0 0.0
          %634 = vmatprep.subr.mxu0 0.0
          %635 = vmatpush2.msra.mxu0 0.0
          %636 = vmatprep.subr.mxu0 0.0
          %637 = vmatpush2.msra.mxu0 0.0
          %638 = vmatprep.subr.mxu0 0.0
          %639 = vmatpush2.msra.mxu0 0.0
          %640 = vmatprep.subr.mxu0 0.0
          %641 = vmatpush2.msra.mxu0 0.0
          %642 = vmatprep.subr.mxu0 0.0
          %643 = vmatpush2.msra.mxu0 0.0
          %644 = vmatprep.subr.mxu0 0.0
          %645 = vmatpush2.msra.mxu0 0.0
          %646 = vmatprep.subr.mxu0 0.0
          %647 = vmatpush2.msra.mxu0 0.0
          %648 = vmatprep.subr.mxu0 0.0
          %649 = vmatpush2.msra.mxu0 0.0
          %650 = vmatprep.subr.mxu0 0.0
          %651 = vmatpush2.msra.mxu0 0.0
          %652 = vmatprep.subr.mxu0 0.0
          %653 = vmatpush2.msra.mxu0 0.0
          %654 = vmatprep.subr.mxu0 0.0
          %655 = vmatpush2.msra.mxu0 0.0
          %656 = vmatprep.subr.mxu0 0.0
          %657 = vmatpush2.msra.mxu0 0.0
          %658 = vmatprep.subr.mxu0 0.0
          %659 = vmatpush2.msra.mxu0 0.0
          %660 = vmatprep.mubr.f32.mxu0 0.0
          %661 = vmatmul.mubr.f32.gmra.mxu0 %v594
          %v662 = vpop.f32.mrf.mxu0
          %v663 = vadd.f32 0.0, %v662
          %v664 = vpop.f32.mrf.mxu0
          %665 = vdwg.mxu0
          %v666 = vmul.f32 %v663, 0.35355338
          %v667 = vld [vmem:[#allocation2] sm:$0xff]
          %v668 = vld [vmem:[#allocation2 + $0x8] sm:$0xff]
          %v669 = vld [vmem:[%s3] sm:$0xff]
          %v670 = vld [vmem:[%s3 + $0x8] sm:$0xff]
          %v671 = vld [vmem:[%s3 + $0x10] sm:$0xff]
          %v672 = vld [vmem:[%s3 + $0x18] sm:$0xff]
          %v674 = vsel %vm577, %v667, 0
          %676 = vmatprep.subr.mxu0 0.0
          %677 = vmatpush1.msra.mxu0 0.0
          %678 = vmatprep.subr.mxu0 0.0
          %679 = vmatpush1.msra.mxu0 0.0
          %680 = vmatprep.subr.mxu0 0.0
          %681 = vmatpush1.msra.mxu0 0.0
          %682 = vmatprep.subr.mxu0 0.0
          %683 = vmatpush1.msra.mxu0 0.0
          %684 = vmatprep.subr.mxu0 0.0
          %685 = vmatpush1.msra.mxu0 0.0
          %686 = vmatprep.subr.mxu0 0.0
          %687 = vmatpush1.msra.mxu0 0.0
          %688 = vmatprep.subr.mxu0 0.0
          %689 = vmatpush1.msra.mxu0 0.0
          %690 = vmatprep.subr.mxu0 0.0
          %691 = vmatpush1.msra.mxu0 0.0
          %692 = vmatprep.subr.mxu0 0.0
          %693 = vmatpush1.msra.mxu0 0.0
          %694 = vmatprep.subr.mxu0 0.0
          %695 = vmatpush1.msra.mxu0 0.0
          %696 = vmatprep.subr.mxu0 0.0
          %697 = vmatpush1.msra.mxu0 0.0
          %698 = vmatprep.subr.mxu0 0.0
          %699 = vmatpush1.msra.mxu0 0.0
          %700 = vmatprep.subr.mxu0 0.0
          %701 = vmatpush1.msra.mxu0 %v672
          %702 = vmatprep.subr.mxu0 0.0
          %703 = vmatpush1.msra.mxu0 %v671
          %704 = vmatprep.subr.mxu0 0.0
          %705 = vmatpush1.msra.mxu0 %v670
          %706 = vmatprep.subr.mxu0 0.0
          %707 = vmatpush1.msra.mxu0 %v669
          %708 = vmatprep.subr.mxu0 0.0
          %709 = vmatpush2.msra.mxu0 0.0
          %710 = vmatprep.subr.mxu0 0.0
          %711 = vmatpush2.msra.mxu0 0.0
          %712 = vmatprep.subr.mxu0 0.0
          %713 = vmatpush2.msra.mxu0 0.0
          %714 = vmatprep.subr.mxu0 0.0
          %715 = vmatpush2.msra.mxu0 0.0
          %716 = vmatprep.subr.mxu0 0.0
          %717 = vmatpush2.msra.mxu0 0.0
          %718 = vmatprep.subr.mxu0 0.0
          %719 = vmatpush2.msra.mxu0 0.0
          %720 = vmatprep.subr.mxu0 0.0
          %721 = vmatpush2.msra.mxu0 0.0
          %722 = vmatprep.subr.mxu0 0.0
          %723 = vmatpush2.msra.mxu0 0.0
          %724 = vmatprep.subr.mxu0 0.0
          %725 = vmatpush2.msra.mxu0 0.0
          %726 = vmatprep.subr.mxu0 0.0
          %727 = vmatpush2.msra.mxu0 0.0
          %728 = vmatprep.subr.mxu0 0.0
          %729 = vmatpush2.msra.mxu0 0.0
          %730 = vmatprep.subr.mxu0 0.0
          %731 = vmatpush2.msra.mxu0 0.0
          %732 = vmatprep.subr.mxu0 0.0
          %733 = vmatpush2.msra.mxu0 0.0
          %734 = vmatprep.subr.mxu0 0.0
          %735 = vmatpush2.msra.mxu0 0.0
          %736 = vmatprep.subr.mxu0 0.0
          %737 = vmatpush2.msra.mxu0 0.0
          %738 = vmatprep.subr.mxu0 0.0
          %739 = vmatpush2.msra.mxu0 0.0
          %740 = vmatprep.mubr.f32.mxu0 0.0
          %741 = vmatmul.mubr.f32.gmra.mxu0 %v674
          %v742 = vpop.f32.mrf.mxu0
          %v743 = vadd.f32 0.0, %v742
          %v744 = vpop.f32.mrf.mxu0
          %745 = vdwg.mxu0
          %v746 = vld [vmem:[#allocation8] sm:$0xff]
          %v747 = vld [vmem:[#allocation8 + $0x8] sm:$0xff]
          %v748 = vld [vmem:[#allocation8 + $0x10] sm:$0xff]
          %v749 = vld [vmem:[#allocation8 + $0x18] sm:$0xff]
          %v751 = vsel %vm577, %v668, 0
          %753 = vmatprep.subr.mxu0 0.0
          %754 = vmatpush1.msra.mxu0 0.0
          %755 = vmatprep.subr.mxu0 0.0
          %756 = vmatpush1.msra.mxu0 0.0
          %757 = vmatprep.subr.mxu0 0.0
          %758 = vmatpush1.msra.mxu0 0.0
          %759 = vmatprep.subr.mxu0 0.0
          %760 = vmatpush1.msra.mxu0 0.0
          %761 = vmatprep.subr.mxu0 0.0
          %762 = vmatpush1.msra.mxu0 0.0
          %763 = vmatprep.subr.mxu0 0.0
          %764 = vmatpush1.msra.mxu0 0.0
          %765 = vmatprep.subr.mxu0 0.0
          %766 = vmatpush1.msra.mxu0 0.0
          %767 = vmatprep.subr.mxu0 0.0
          %768 = vmatpush1.msra.mxu0 0.0
          %769 = vmatprep.subr.mxu0 0.0
          %770 = vmatpush1.msra.mxu0 0.0
          %771 = vmatprep.subr.mxu0 0.0
          %772 = vmatpush1.msra.mxu0 0.0
          %773 = vmatprep.subr.mxu0 0.0
          %774 = vmatpush1.msra.mxu0 0.0
          %775 = vmatprep.subr.mxu0 0.0
          %776 = vmatpush1.msra.mxu0 0.0
          %777 = vmatprep.subr.mxu0 0.0
          %778 = vmatpush1.msra.mxu0 %v749
          %779 = vmatprep.subr.mxu0 0.0
          %780 = vmatpush1.msra.mxu0 %v748
          %781 = vmatprep.subr.mxu0 0.0
          %782 = vmatpush1.msra.mxu0 %v747
          %783 = vmatprep.subr.mxu0 0.0
          %784 = vmatpush1.msra.mxu0 %v746
          %785 = vmatprep.subr.mxu0 0.0
          %786 = vmatpush2.msra.mxu0 0.0
          %787 = vmatprep.subr.mxu0 0.0
          %788 = vmatpush2.msra.mxu0 0.0
          %789 = vmatprep.subr.mxu0 0.0
          %790 = vmatpush2.msra.mxu0 0.0
          %791 = vmatprep.subr.mxu0 0.0
          %792 = vmatpush2.msra.mxu0 0.0
          %793 = vmatprep.subr.mxu0 0.0
          %794 = vmatpush2.msra.mxu0 0.0
          %795 = vmatprep.subr.mxu0 0.0
          %796 = vmatpush2.msra.mxu0 0.0
          %797 = vmatprep.subr.mxu0 0.0
          %798 = vmatpush2.msra.mxu0 0.0
          %799 = vmatprep.subr.mxu0 0.0
          %800 = vmatpush2.msra.mxu0 0.0
          %801 = vmatprep.subr.mxu0 0.0
          %802 = vmatpush2.msra.mxu0 0.0
          %803 = vmatprep.subr.mxu0 0.0
          %804 = vmatpush2.msra.mxu0 0.0
          %805 = vmatprep.subr.mxu0 0.0
          %806 = vmatpush2.msra.mxu0 0.0
          %807 = vmatprep.subr.mxu0 0.0
          %808 = vmatpush2.msra.mxu0 0.0
          %809 = vmatprep.subr.mxu0 0.0
          %810 = vmatpush2.msra.mxu0 0.0
          %811 = vmatprep.subr.mxu0 0.0
          %812 = vmatpush2.msra.mxu0 0.0
          %813 = vmatprep.subr.mxu0 0.0
          %814 = vmatpush2.msra.mxu0 0.0
          %815 = vmatprep.subr.mxu0 0.0
          %816 = vmatpush2.msra.mxu0 0.0
          %817 = vmatprep.mubr.f32.mxu0 0.0
          %818 = vmatmul.mubr.f32.gmra.mxu0 %v751
          %v819 = vpop.f32.mrf.mxu0
          %v820 = vadd.f32 0.0, %v819
          %v821 = vpop.f32.mrf.mxu0
          %822 = vdwg.mxu0
          %v823 = vlaneseq
          %v824 = vshrl.u32 %v823, 7
          %v825 = vsub.s32 0, %v824
          %v826 = vrot.slane %v666, %v825
          %v827 = vmul.f32 %v743, %v826
          %v829 = vsel %vm577, %v827, 0
          %831 = vmatprep.subr.mxu0 0.0
          %832 = vmatpush1.msra.mxu0 0.0
          %833 = vmatprep.subr.mxu0 0.0
          %834 = vmatpush1.msra.mxu0 0.0
          %835 = vmatprep.subr.mxu0 0.0
          %836 = vmatpush1.msra.mxu0 0.0
          %837 = vmatprep.subr.mxu0 0.0
          %838 = vmatpush1.msra.mxu0 0.0
          %839 = vmatprep.subr.mxu0 0.0
          %840 = vmatpush1.msra.mxu0 0.0
          %841 = vmatprep.subr.mxu0 0.0
          %842 = vmatpush1.msra.mxu0 0.0
          %843 = vmatprep.subr.mxu0 0.0
          %844 = vmatpush1.msra.mxu0 0.0
          %845 = vmatprep.subr.mxu0 0.0
          %846 = vmatpush1.msra.mxu0 0.0
          %847 = vmatprep.subr.mxu0 0.0
          %848 = vmatpush1.msra.mxu0 0.0
          %849 = vmatprep.subr.mxu0 0.0
          %850 = vmatpush1.msra.mxu0 0.0
          %851 = vmatprep.subr.mxu0 0.0
          %852 = vmatpush1.msra.mxu0 0.0
          %853 = vmatprep.subr.mxu0 0.0
          %854 = vmatpush1.msra.mxu0 0.0
          %855 = vmatprep.subr.mxu0 0.0
          %856 = vmatpush1.msra.mxu0 %v586
          %857 = vmatprep.subr.mxu0 0.0
          %858 = vmatpush1.msra.mxu0 %v585
          %859 = vmatprep.subr.mxu0 0.0
          %860 = vmatpush1.msra.mxu0 %v584
          %861 = vmatprep.subr.mxu0 0.0
          %862 = vmatpush1.msra.mxu0 %v583
          %863 = vmatprep.subr.mxu0 0.0
          %864 = vmatpush2.msra.mxu0 0.0
          %865 = vmatprep.subr.mxu0 0.0
          %866 = vmatpush2.msra.mxu0 0.0
          %867 = vmatprep.subr.mxu0 0.0
          %868 = vmatpush2.msra.mxu0 0.0
          %869 = vmatprep.subr.mxu0 0.0
          %870 = vmatpush2.msra.mxu0 0.0
          %871 = vmatprep.subr.mxu0 0.0
          %872 = vmatpush2.msra.mxu0 0.0
          %873 = vmatprep.subr.mxu0 0.0
          %874 = vmatpush2.msra.mxu0 0.0
          %875 = vmatprep.subr.mxu0 0.0
          %876 = vmatpush2.msra.mxu0 0.0
          %877 = vmatprep.subr.mxu0 0.0
          %878 = vmatpush2.msra.mxu0 0.0
          %879 = vmatprep.subr.mxu0 0.0
          %880 = vmatpush2.msra.mxu0 0.0
          %881 = vmatprep.subr.mxu0 0.0
          %882 = vmatpush2.msra.mxu0 0.0
          %883 = vmatprep.subr.mxu0 0.0
          %884 = vmatpush2.msra.mxu0 0.0
          %885 = vmatprep.subr.mxu0 0.0
          %886 = vmatpush2.msra.mxu0 0.0
          %887 = vmatprep.subr.mxu0 0.0
          %888 = vmatpush2.msra.mxu0 0.0
          %889 = vmatprep.subr.mxu0 0.0
          %890 = vmatpush2.msra.mxu0 0.0
          %891 = vmatprep.subr.mxu0 0.0
          %892 = vmatpush2.msra.mxu0 0.0
          %893 = vmatprep.subr.mxu0 0.0
          %894 = vmatpush2.msra.mxu0 0.0
          %895 = vmatprep.mubr.f32.mxu0 0.0
          %896 = vmatmul.mubr.f32.gmra.mxu0 %v829
          %v897 = vpop.f32.mrf.mxu0
          %v898 = vadd.f32 0.0, %v897
          %v899 = vpop.f32.mrf.mxu0
          %900 = vdwg.mxu0
          %vm901 = vcmask 31744
          %v902 = vsel %vm901, %v898, -inf
          %v903 = vrot.slane %v902, 4
          %v904 = vmax.f32 %v902, %v903
          %v905 = vrot.slane %v904, 2
          %v906 = vmax.f32 %v904, %v905
          %v907 = vrot.slane %v906, 1
          %v908 = vmax.f32 %v906, %v907
          %v909 = vsub.f32 %v898, %v908
          %v910 = vmul.f32 %v909, 1.442695
          %v911 = vpow.pop %v910
          %v912 = vsel %vm901, %v911, 0.0
          %v913 = vrot.slane %v912, 4
          %v914 = vadd.f32 %v912, %v913
          %v915 = vrot.slane %v914, 2
          %v916 = vadd.f32 %v914, %v915
          %v917 = vrot.slane %v916, 1
          %v918 = vadd.f32 %v916, %v917
          %v919 = vrcp.pop %v918
          %v920 = vmul.f32 %v911, %v919
          %v922 = vsel %vm901, %v920, 0
          %vm924 = vcmask 1043456
          %v926 = vsel %vm924, %v587, 0
          %928 = vmatprep.subr.mxu0 0.0
          %929 = vmatpush1.msra.mxu0 0.0
          %930 = vmatprep.subr.mxu0 0.0
          %931 = vmatpush1.msra.mxu0 0.0
          %932 = vmatprep.subr.mxu0 0.0
          %933 = vmatpush1.msra.mxu0 0.0
          %934 = vmatprep.subr.mxu0 0.0
          %935 = vmatpush1.msra.mxu0 0.0
          %936 = vmatprep.subr.mxu0 0.0
          %937 = vmatpush1.msra.mxu0 0.0
          %938 = vmatprep.subr.mxu0 0.0
          %939 = vmatpush1.msra.mxu0 0.0
          %940 = vmatprep.subr.mxu0 0.0
          %941 = vmatpush1.msra.mxu0 0.0
          %942 = vmatprep.subr.mxu0 0.0
          %943 = vmatpush1.msra.mxu0 0.0
          %944 = vmatprep.subr.mxu0 0.0
          %945 = vmatpush1.msra.mxu0 0.0
          %946 = vmatprep.subr.mxu0 0.0
          %947 = vmatpush1.msra.mxu0 0.0
          %948 = vmatprep.subr.mxu0 0.0
          %949 = vmatpush1.msra.mxu0 0.0
          %950 = vmatprep.subr.mxu0 0.0
          %951 = vmatpush1.msra.mxu0 0.0
          %952 = vmatprep.subr.mxu0 0.0
          %953 = vmatpush1.msra.mxu0 0.0
          %954 = vmatprep.subr.mxu0 0.0
          %955 = vmatpush1.msra.mxu0 0.0
          %956 = vmatprep.subr.mxu0 0.0
          %957 = vmatpush1.msra.mxu0 0.0
          %958 = vmatprep.subr.mxu0 0.0
          %959 = vmatpush1.msra.mxu0 %v926
          %960 = vmatprep.subr.mxu0 0.0
          %961 = vmatpush2.msra.mxu0 0.0
          %962 = vmatprep.subr.mxu0 0.0
          %963 = vmatpush2.msra.mxu0 0.0
          %964 = vmatprep.subr.mxu0 0.0
          %965 = vmatpush2.msra.mxu0 0.0
          %966 = vmatprep.subr.mxu0 0.0
          %967 = vmatpush2.msra.mxu0 0.0
          %968 = vmatprep.subr.mxu0 0.0
          %969 = vmatpush2.msra.mxu0 0.0
          %970 = vmatprep.subr.mxu0 0.0
          %971 = vmatpush2.msra.mxu0 0.0
          %972 = vmatprep.subr.mxu0 0.0
          %973 = vmatpush2.msra.mxu0 0.0
          %974 = vmatprep.subr.mxu0 0.0
          %975 = vmatpush2.msra.mxu0 0.0
          %976 = vmatprep.subr.mxu0 0.0
          %977 = vmatpush2.msra.mxu0 0.0
          %978 = vmatprep.subr.mxu0 0.0
          %979 = vmatpush2.msra.mxu0 0.0
          %980 = vmatprep.subr.mxu0 0.0
          %981 = vmatpush2.msra.mxu0 0.0
          %982 = vmatprep.subr.mxu0 0.0
          %983 = vmatpush2.msra.mxu0 0.0
          %984 = vmatprep.subr.mxu0 0.0
          %985 = vmatpush2.msra.mxu0 0.0
          %986 = vmatprep.subr.mxu0 0.0
          %987 = vmatpush2.msra.mxu0 0.0
          %988 = vmatprep.subr.mxu0 0.0
          %989 = vmatpush2.msra.mxu0 0.0
          %990 = vmatprep.subr.mxu0 0.0
          %991 = vmatpush2.msra.mxu0 0.0
          %992 = vmatprep.mubr.f32.mxu0 0.0
          %993 = vmatmul.mubr.f32.gmra.mxu0 %v922
          %v994 = vpop.f32.mrf.mxu0
          %v995 = vadd.f32 0.0, %v994
          %v996 = vpop.f32.mrf.mxu0
          %997 = vdwg.mxu0
          %v998 = vmul.f32 %v995, %v820
          %v999 = vsel %vm577, %v998, 0.0
          %v1000 = vrot.slane %v999, 4
          %v1001 = vadd.f32 %v999, %v1000
          %v1002 = vrot.slane %v1001, 2
          %v1003 = vadd.f32 %v1001, %v1002
          %v1004 = vrot.slane %v1003, 1
          %v1005 = vadd.f32 %v1003, %v1004
          %v1006 = vld [vmem:[#allocation9] sm:$0xff]
          %v1007 = vld [vmem:[#allocation9 + $0x8] sm:$0xff]
          %v1008 = vld [vmem:[#allocation9 + $0x10] sm:$0xff]
          %v1009 = vld [vmem:[#allocation9 + $0x18] sm:$0xff]
          %v1010 = vld [vmem:[#allocation11] sm:$0x1]
          %v1012 = vsel %vm577, %v1005, 0
          %1014 = vmatprep.subr.mxu0 0.0
          %1015 = vmatpush1.msra.mxu0 0.0
          %1016 = vmatprep.subr.mxu0 0.0
          %1017 = vmatpush1.msra.mxu0 0.0
          %1018 = vmatprep.subr.mxu0 0.0
          %1019 = vmatpush1.msra.mxu0 0.0
          %1020 = vmatprep.subr.mxu0 0.0
          %1021 = vmatpush1.msra.mxu0 0.0
          %1022 = vmatprep.subr.mxu0 0.0
          %1023 = vmatpush1.msra.mxu0 0.0
          %1024 = vmatprep.subr.mxu0 0.0
          %1025 = vmatpush1.msra.mxu0 0.0
          %1026 = vmatprep.subr.mxu0 0.0
          %1027 = vmatpush1.msra.mxu0 0.0
          %1028 = vmatprep.subr.mxu0 0.0
          %1029 = vmatpush1.msra.mxu0 0.0
          %1030 = vmatprep.subr.mxu0 0.0
          %1031 = vmatpush1.msra.mxu0 0.0
          %1032 = vmatprep.subr.mxu0 0.0
          %1033 = vmatpush1.msra.mxu0 0.0
          %1034 = vmatprep.subr.mxu0 0.0
          %1035 = vmatpush1.msra.mxu0 0.0
          %1036 = vmatprep.subr.mxu0 0.0
          %1037 = vmatpush1.msra.mxu0 0.0
          %1038 = vmatprep.subr.mxu0 0.0
          %1039 = vmatpush1.msra.mxu0 %v1009
          %1040 = vmatprep.subr.mxu0 0.0
          %1041 = vmatpush1.msra.mxu0 %v1008
          %1042 = vmatprep.subr.mxu0 0.0
          %1043 = vmatpush1.msra.mxu0 %v1007
          %1044 = vmatprep.subr.mxu0 0.0
          %1045 = vmatpush1.msra.mxu0 %v1006
          %1046 = vmatprep.subr.mxu0 0.0
          %1047 = vmatpush2.msra.mxu0 0.0
          %1048 = vmatprep.subr.mxu0 0.0
          %1049 = vmatpush2.msra.mxu0 0.0
          %1050 = vmatprep.subr.mxu0 0.0
          %1051 = vmatpush2.msra.mxu0 0.0
          %1052 = vmatprep.subr.mxu0 0.0
          %1053 = vmatpush2.msra.mxu0 0.0
          %1054 = vmatprep.subr.mxu0 0.0
          %1055 = vmatpush2.msra.mxu0 0.0
          %1056 = vmatprep.subr.mxu0 0.0
          %1057 = vmatpush2.msra.mxu0 0.0
          %1058 = vmatprep.subr.mxu0 0.0
          %1059 = vmatpush2.msra.mxu0 0.0
          %1060 = vmatprep.subr.mxu0 0.0
          %1061 = vmatpush2.msra.mxu0 0.0
          %1062 = vmatprep.subr.mxu0 0.0
          %1063 = vmatpush2.msra.mxu0 0.0
          %1064 = vmatprep.subr.mxu0 0.0
          %1065 = vmatpush2.msra.mxu0 0.0
          %1066 = vmatprep.subr.mxu0 0.0
          %1067 = vmatpush2.msra.mxu0 0.0
          %1068 = vmatprep.subr.mxu0 0.0
          %1069 = vmatpush2.msra.mxu0 0.0
          %1070 = vmatprep.subr.mxu0 0.0
          %1071 = vmatpush2.msra.mxu0 0.0
          %1072 = vmatprep.subr.mxu0 0.0
          %1073 = vmatpush2.msra.mxu0 0.0
          %1074 = vmatprep.subr.mxu0 0.0
          %1075 = vmatpush2.msra.mxu0 0.0
          %1076 = vmatprep.subr.mxu0 0.0
          %1077 = vmatpush2.msra.mxu0 0.0
          %1078 = vmatprep.mubr.f32.mxu0 0.0
          %1079 = vmatmul.mubr.f32.gmra.mxu0 %v1012
          %v1080 = vpop.f32.mrf.mxu0
          %v1081 = vadd.f32 %v1010, %v1080
          %v1082 = vpop.f32.mrf.mxu0
          %1083 = vdwg.mxu0
          %vm1084 = vcmask 253952
          %1085 = vst.msk [vmem:[%s476] sm:$0x1] %vm1084, %v1081
        $region88: #{tpu_custom_call.1} parent=59 // pred_fallthru
          _
        %s1086 = sand.u32 %s278, 1
        %s1087 = scalar_lea.sflag [#allocation5], %s1086
        %s1088 = sand.u32 %s278, 1
        %s1089 = scalar_lea.vmem [#allocation12], %s1088
        // Predicated region
        $region89: #{tpu_custom_call.1} parent=59 // pred_check
          %p1090 = pneg %p288
        $region90: #{tpu_custom_call.1} parent=59 // pred_check_branch
          %1092 = sbr.rel (%p1090) target = $region92
        $region91: #{tpu_custom_call.1} parent=59 // pred_region
          %s1094 = ssub.s32 16, 16
          %1095 = vsyncadd %s1087, %s1094
          %s1096 = smul.addr %s35, 16
          %s1097 = scalar_lea.hbm %s10, %s1096
          %s1099 = sshll.u32 %s1089, 4
          %s1100 = int_to_ptr.vmem [resolvable:$true] %s1099
          %1102 = dma.vmem_to_hbm [thread:$0]  %s1100, 16, %s1097, %s1087
        $region92: #{tpu_custom_call.1} parent=59 // pred_fallthru
          _
      $region60: #{tpu_custom_call.1} parent=5 // pred_fallthru
        _
      %p1103 = scmp.le.s32.totalorder 2, %s26
      // Predicated region
      $region93: #{tpu_custom_call.1} parent=5 // pred_check
        %p1104 = pneg %p1103
      $region94: #{tpu_custom_call.1} parent=5 // pred_check_branch
        %1106 = sbr.rel (%p1104) target = $region96
      $region95: #{tpu_custom_call.1} parent=5 // pred_region
        %s1107 = ssub.s32 %s26, 2
        // Predicated region
        $region97: #{tpu_custom_call.1} parent=95 // pred_check
          %p1108 = pneg %p294
        $region98: #{tpu_custom_call.1} parent=95 // pred_check_branch
          %1110 = sbr.rel (%p1108) target = $region100
        $region99: #{tpu_custom_call.1} parent=95 // pred_region
          %s1111 = sand.u32 %s279, 1
          %s1112 = scalar_lea.sflag [#allocation5], %s1111
          %s1113 = sand.u32 %s279, 1
          %s1114 = scalar_lea.vmem [#allocation12], %s1113
          %1115 = dma.done %s1112, 16
        $region100: #{tpu_custom_call.1} parent=95 // pred_fallthru
          _
      $region96: #{tpu_custom_call.1} parent=5 // pred_fallthru
        _
    $region6: #{tpu_custom_call.1} parent=1 // loop_footer
      %s30 = sadd.s32 1, %s26
    $region7: #{tpu_custom_call.1} parent=1 // loop_footer_branch
      %25 = sbr.rel target = $region3
    $region8: #{tpu_custom_call.1} parent=1 // loop_exit
      _
    %1116 = vsyncpa [#allocation4], 1
    %s1117 = scalar_lea.sflag [#allocation4], 1
    %1118 = vsyncpa %s1117, 1
    %1119 = vsyncpa [#allocation7], 1
    %s1120 = scalar_lea.sflag [#allocation7], 1
    %1121 = vsyncpa %s1120, 1
    %1122 = vsyncpa [#allocation10], 1
    %1123 = vsyncpa [#allocation5], 1
    %s1124 = scalar_lea.sflag [#allocation5], 1
    %1125 = vsyncpa %s1124, 1

</llo_original>
